<compile_context>
chip_gen: v5e
topology: v5e:2x2
jax: 0.10.0
libtpu: 0.0.40
codegen_flags: <defaults>
</compile_context>

<pallas_src>
import functools

import jax
import jax.numpy as jnp
from jax.experimental import pallas as pl
from jax.experimental.pallas import tpu as pltpu

# ---------------- problem sizes (small, consistent with the module) ----------
B, C, T, H, W = 2, 32, 4, 14, 14          # feature_list[0] = C


# ------------- fused kernel: spatial 3x3 conv + temporal (3,1,1) conv --------
def r2p1d_kernel(xcol_ref, w1_ref, b1_ref, w2_ref, b2_ref, o_ref, ystk_ref, *,
                 c, frame, nflat):
    # --- conv1: one MXU pass, K = 9*C = 288, N = nflat (lane-dense) ---------
    y1 = jnp.dot(w1_ref[...], xcol_ref[0],
                 preferred_element_type=jnp.float32)            # (C, nflat) f32
    y1 = (y1 + b1_ref[...]).astype(jnp.bfloat16)
    # (columns belonging to the padded spatial border ring are garbage; conv2
    #  is spatially pointwise so they never contaminate interior columns, and
    #  the wrapper discards them.)

    tail = nflat - frame                       # lane-aligned (multiple of 128)
    zero_frame = jnp.zeros((c, frame), jnp.bfloat16)

    # --- stack the 3 temporal taps along K in a VMEM scratch ----------------
    # row block kt holds, at column n, y1[:, n + (kt-1)*frame] (0 outside).
    ystk_ref[c:2 * c, :] = y1                                   # kt = 1 (same)
    ystk_ref[0:c, 0:frame] = zero_frame                         # kt = 0 (t-1)
    ystk_ref[0:c, frame:frame + tail] = y1[:, :tail]
    ystk_ref[2 * c:3 * c, 0:tail] = y1[:, frame:]               # kt = 2 (t+1)
    ystk_ref[2 * c:3 * c, tail:nflat] = zero_frame

    # --- conv2: one MXU pass, K = 3*C = 96 ----------------------------------
    out = jnp.dot(w2_ref[...], ystk_ref[...],
                  preferred_element_type=jnp.float32)           # (C, nflat) f32
    o_ref[0] = out + b2_ref[...]


# ------------- wrapper: layout plumbing (im2col) in XLA, one pallas_call -----
def r2p1d_forward(x, params):
    """x: (B, C, T, H, W) float32 -- PyTorch NCTHW video layout."""
    b, c, t, h, w = x.shape
    hp, wp = h + 2, w + 2
    frame = hp * wp
    nflat = t * frame

    # spatial zero-pad, flatten (T,Hp,Wp) -> lanes (channels stay leading)
    xpad = jnp.pad(x, ((0, 0), (0, 0), (0, 0), (1, 1), (1, 1)))   # (B,C,T,Hp,Wp)
    xflat = xpad.reshape(b, c, nflat)

    # full im2col along the flat axis: tap offset d = (kh-1)*wp + (kw-1).
    # K-row ordering is (kh, kw, cin) to match the w1 relayout below.
    g = wp + 1                                 # max |d|
    xg = jnp.pad(xflat, ((0, 0), (0, 0), (g, g)))                 # (B,C,nflat+2g)
    taps = []
    for kh in range(3):
        for kw in range(3):
            d = (kh - 1) * wp + (kw - 1)
            taps.append(xg[:, :, g + d:g + d + nflat])
    xcol = jnp.concatenate(taps, axis=1).astype(jnp.bfloat16)     # (B, 9C, nflat)

    kernel = functools.partial(r2p1d_kernel, c=c, frame=frame, nflat=nflat)
    out_flat = pl.pallas_call(
        kernel,
        out_shape=jax.ShapeDtypeStruct((b, c, nflat), jnp.float32),
        grid=(b,),
        in_specs=[
            pl.BlockSpec((1, 9 * c, nflat), lambda i: (i, 0, 0)),  # im2col slab
            pl.BlockSpec((c, 9 * c), lambda i: (0, 0)),            # conv1 weight
            pl.BlockSpec((c, 1), lambda i: (0, 0)),                # conv1 bias
            pl.BlockSpec((c, 3 * c), lambda i: (0, 0)),            # conv2 weight
            pl.BlockSpec((c, 1), lambda i: (0, 0)),                # conv2 bias
        ],
        out_specs=pl.BlockSpec((1, c, nflat), lambda i: (i, 0, 0)),
        scratch_shapes=[pltpu.VMEM((3 * c, nflat), jnp.bfloat16)],
        compiler_params=pltpu.CompilerParams(dimension_semantics=("parallel",)),
    )(xcol, params["w1"], params["b1"], params["w2"], params["b2"])

    # drop the padded spatial border ring; already channels-first (NCTHW)
    out = out_flat.reshape(b, c, t, hp, wp)[:, :, :, 1:h + 1, 1:w + 1]
    return out


# ------------- parameter init (PyTorch layouts) + kernel-layout prep ---------
def init_params(key):
    k1, k2, k3, k4 = jax.random.split(key, 4)
    fan1 = C * 3 * 3                                   # kaiming_normal_, fan_in
    conv1_w = jax.random.normal(k1, (C, C, 3, 3), jnp.float32) * jnp.sqrt(2.0 / fan1)
    conv1_b = jax.random.uniform(k2, (C,), jnp.float32,
                                 -1.0 / jnp.sqrt(fan1), 1.0 / jnp.sqrt(fan1))
    fan2 = C * 3 * 1 * 1
    conv2_w = jax.random.normal(k3, (C, C, 3, 1, 1), jnp.float32) * jnp.sqrt(2.0 / fan2)
    conv2_b = jax.random.uniform(k4, (C,), jnp.float32,
                                 -1.0 / jnp.sqrt(fan2), 1.0 / jnp.sqrt(fan2))
    return dict(conv1_w=conv1_w, conv1_b=conv1_b,
                conv2_w=conv2_w, conv2_b=conv2_b)


def prepare_params(p):
    c = p["conv1_b"].shape[0]
    # conv1: (Cout, Cin, kh, kw) -> (Cout, kh, kw, Cin) -> (Cout, 9*Cin)
    #        K-index = (kh*3+kw)*C + cin  (matches wrapper im2col ordering)
    w1 = jnp.transpose(p["conv1_w"], (0, 2, 3, 1)).reshape(c, 9 * c)
    # conv2: (Cout, Cin, kt, 1, 1) -> (Cout, kt, Cin) -> (Cout, 3*Cin)
    #        K-index = kt*C + cin  (matches the ystk scratch row blocks)
    w2 = jnp.transpose(p["conv2_w"][:, :, :, 0, 0], (0, 2, 1)).reshape(c, 3 * c)
    return dict(w1=w1.astype(jnp.bfloat16), b1=p["conv1_b"].reshape(c, 1),
                w2=w2.astype(jnp.bfloat16), b2=p["conv2_b"].reshape(c, 1))


# ------------- pure-JAX reference (mirrors the PyTorch forward) --------------
def reference_forward(x, p):
    b, c, t, h, w = x.shape
    xs = jnp.transpose(x, (0, 2, 1, 3, 4)).reshape(b * t, c, h, w)   # swap
    y = jax.lax.conv_general_dilated(
        xs, p["conv1_w"], window_strides=(1, 1), padding=((1, 1), (1, 1)),
        dimension_numbers=("NCHW", "OIHW", "NCHW"),
        precision=jax.lax.Precision.HIGHEST)
    y = y + p["conv1_b"][None, :, None, None]
    y = jnp.transpose(y.reshape(b, t, c, h, w), (0, 2, 1, 3, 4))     # unswap
    z = jax.lax.conv_general_dilated(
        y, p["conv2_w"], window_strides=(1, 1, 1),
        padding=((1, 1), (0, 0), (0, 0)),
        dimension_numbers=("NCDHW", "OIDHW", "NCDHW"),
        precision=jax.lax.Precision.HIGHEST)
    return z + p["conv2_b"][None, :, None, None, None]


if __name__ == "__main__":
    key = jax.random.PRNGKey(0)
    kx, kp = jax.random.split(key)
    x = jax.random.normal(kx, (B, C, T, H, W), jnp.float32)
    torch_layout_params = init_params(kp)
    params = prepare_params(torch_layout_params)

    out = jax.jit(r2p1d_forward)(x, params)
    out = jax.block_until_ready(out)

    ref = reference_forward(x, torch_layout_params)
    assert out.shape == (B, C, T, H, W), out.shape
    max_err = float(jnp.max(jnp.abs(out - ref)))
    # bf16 MXU operands (per the perf review) vs an f32 / Precision.HIGHEST
    # reference: allow bf16-level tolerance (output std is ~3.5).
    assert jnp.allclose(out, ref, atol=5e-2, rtol=5e-2), max_err
    print("KERNEL_OK")
</pallas_src>

<mosaic_0001>
module attributes {stable_mosaic.version = 11 : i64} {
  func.func @r2p1d_kernel(%arg0: i32, %arg1: memref<1x288x1024xbf16, #tpu.memory_space<vmem>>, %arg2: memref<32x288xbf16, #tpu.memory_space<vmem>>, %arg3: memref<32x1xf32, #tpu.memory_space<vmem>>, %arg4: memref<32x96xbf16, #tpu.memory_space<vmem>>, %arg5: memref<32x1xf32, #tpu.memory_space<vmem>>, %arg6: memref<1x32x1024xf32, #tpu.memory_space<vmem>>, %arg7: memref<96x1024xbf16, #tpu.memory_space<vmem>>) attributes {dimension_semantics = [#tpu.dimension_semantics<parallel>], iteration_bounds = array<i64: 2>, scalar_prefetch = 0 : i64, scratch_operands = 1 : i64, tpu.core_type = #tpu.core_type<tc>, window_params = [{transform_indices = @transform_0, window_bounds = array<i64: 1, 288, 1024>}, {pipeline_mode = #tpu.pipeline_mode<synchronous>, transform_indices = @transform_1, window_bounds = array<i64: 32, 288>}, {pipeline_mode = #tpu.pipeline_mode<synchronous>, transform_indices = @transform_2, window_bounds = array<i64: 32, 1>}, {pipeline_mode = #tpu.pipeline_mode<synchronous>, transform_indices = @transform_3, window_bounds = array<i64: 32, 96>}, {pipeline_mode = #tpu.pipeline_mode<synchronous>, transform_indices = @transform_4, window_bounds = array<i64: 32, 1>}, {transform_indices = @transform_5, window_bounds = array<i64: 1, 32, 1024>}]} {
    %c0 = arith.constant 0 : index
    %c0_0 = arith.constant 0 : index
    %0 = vector.load %arg2[%c0, %c0_0] : memref<32x288xbf16, #tpu.memory_space<vmem>>, vector<32x288xbf16>
    %c0_1 = arith.constant 0 : index
    %c0_2 = arith.constant 0 : index
    %c0_3 = arith.constant 0 : index
    %1 = vector.load %arg1[%c0_1, %c0_2, %c0_3] : memref<1x288x1024xbf16, #tpu.memory_space<vmem>>, vector<1x288x1024xbf16>
    %2 = vector.shape_cast %1 : vector<1x288x1024xbf16> to vector<288x1024xbf16>
    %cst = arith.constant dense<0.000000e+00> : vector<32x1024xf32>
    %3 = tpu.matmul %0, %2, %cst {dimension_numbers = #tpu.dot_dimension_numbers<[1], [0], [0], [1], [0, 0, 1, 1], [], []>} : vector<32x288xbf16>, vector<288x1024xbf16>, vector<32x1024xf32> -> vector<32x1024xf32>
    %c0_4 = arith.constant 0 : index
    %c0_5 = arith.constant 0 : index
    %4 = vector.load %arg3[%c0_4, %c0_5] : memref<32x1xf32, #tpu.memory_space<vmem>>, vector<32x1xf32>
    %5 = vector.broadcast %4 : vector<32x1xf32> to vector<32x1024xf32>
    %6 = arith.addf %3, %5 : vector<32x1024xf32>
    %7 = arith.truncf %6 : vector<32x1024xf32> to vector<32x1024xbf16>
    %cst_6 = arith.constant 0.000000e+00 : bf16
    %8 = vector.broadcast %cst_6 : bf16 to vector<32x256xbf16>
    %c32 = arith.constant 32 : index
    %c0_7 = arith.constant 0 : index
    %9 = vector.load %arg7[%c32, %c0_7] : memref<96x1024xbf16, #tpu.memory_space<vmem>>, vector<32x1024xbf16>
    tpu.vector_store %arg7[%c32, %c0_7], %7 {strides = array<i32>} : memref<96x1024xbf16, #tpu.memory_space<vmem>>, vector<32x1024xbf16>,
    %c0_8 = arith.constant 0 : index
    %c0_9 = arith.constant 0 : index
    %10 = vector.load %arg7[%c0_8, %c0_9] : memref<96x1024xbf16, #tpu.memory_space<vmem>>, vector<32x256xbf16>
    tpu.vector_store %arg7[%c0_8, %c0_9], %8 {strides = array<i32>} : memref<96x1024xbf16, #tpu.memory_space<vmem>>, vector<32x256xbf16>,
    %11 = vector.extract_strided_slice %7 {offsets = [0, 0], sizes = [32, 768], strides = [1, 1]} : vector<32x1024xbf16> to vector<32x768xbf16>
    %c0_10 = arith.constant 0 : index
    %c256 = arith.constant 256 : index
    %12 = vector.load %arg7[%c0_10, %c256] : memref<96x1024xbf16, #tpu.memory_space<vmem>>, vector<32x768xbf16>
    tpu.vector_store %arg7[%c0_10, %c256], %11 {strides = array<i32>} : memref<96x1024xbf16, #tpu.memory_space<vmem>>, vector<32x768xbf16>,
    %13 = vector.extract_strided_slice %7 {offsets = [0, 256], sizes = [32, 768], strides = [1, 1]} : vector<32x1024xbf16> to vector<32x768xbf16>
    %c64 = arith.constant 64 : index
    %c0_11 = arith.constant 0 : index
    %14 = vector.load %arg7[%c64, %c0_11] : memref<96x1024xbf16, #tpu.memory_space<vmem>>, vector<32x768xbf16>
    tpu.vector_store %arg7[%c64, %c0_11], %13 {strides = array<i32>} : memref<96x1024xbf16, #tpu.memory_space<vmem>>, vector<32x768xbf16>,
    %c64_12 = arith.constant 64 : index
    %c768 = arith.constant 768 : index
    %15 = vector.load %arg7[%c64_12, %c768] : memref<96x1024xbf16, #tpu.memory_space<vmem>>, vector<32x256xbf16>
    tpu.vector_store %arg7[%c64_12, %c768], %8 {strides = array<i32>} : memref<96x1024xbf16, #tpu.memory_space<vmem>>, vector<32x256xbf16>,
    %c0_13 = arith.constant 0 : index
    %c0_14 = arith.constant 0 : index
    %16 = vector.load %arg4[%c0_13, %c0_14] : memref<32x96xbf16, #tpu.memory_space<vmem>>, vector<32x96xbf16>
    %c0_15 = arith.constant 0 : index
    %c0_16 = arith.constant 0 : index
    %17 = vector.load %arg7[%c0_15, %c0_16] : memref<96x1024xbf16, #tpu.memory_space<vmem>>, vector<96x1024xbf16>
    %cst_17 = arith.constant dense<0.000000e+00> : vector<32x1024xf32>
    %18 = tpu.matmul %16, %17, %cst_17 {dimension_numbers = #tpu.dot_dimension_numbers<[1], [0], [0], [1], [0, 0, 1, 1], [], []>} : vector<32x96xbf16>, vector<96x1024xbf16>, vector<32x1024xf32> -> vector<32x1024xf32>
    %c0_18 = arith.constant 0 : index
    %c0_19 = arith.constant 0 : index
    %19 = vector.load %arg5[%c0_18, %c0_19] : memref<32x1xf32, #tpu.memory_space<vmem>>, vector<32x1xf32>
    %20 = vector.broadcast %19 : vector<32x1xf32> to vector<32x1024xf32>
    %21 = arith.addf %18, %20 : vector<32x1024xf32>
    %c0_20 = arith.constant 0 : index
    %c0_21 = arith.constant 0 : index
    %c0_22 = arith.constant 0 : index
    %22 = vector.load %arg6[%c0_20, %c0_21, %c0_22] : memref<1x32x1024xf32, #tpu.memory_space<vmem>>, vector<1x32x1024xf32>
    %23 = vector.shape_cast %22 : vector<1x32x1024xf32> to vector<32x1024xf32>
    %24 = vector.shape_cast %21 : vector<32x1024xf32> to vector<1x32x1024xf32>
    tpu.vector_store %arg6[%c0_20, %c0_21, %c0_22], %24 {strides = array<i32>} : memref<1x32x1024xf32, #tpu.memory_space<vmem>>, vector<1x32x1024xf32>,
    return
  }
  func.func @transform_0(%arg0: i32) -> (i32, i32, i32) {
    %c0_i32 = arith.constant 0 : i32
    %c0_i32_0 = arith.constant 0 : i32
    %c0_i32_1 = arith.constant 0 : i32
    return %arg0, %c0_i32, %c0_i32_0 : i32, i32, i32
  }
  func.func @transform_1(%arg0: i32) -> (i32, i32) {
    %c0_i32 = arith.constant 0 : i32
    %c0_i32_0 = arith.constant 0 : i32
    %c0_i32_1 = arith.constant 0 : i32
    return %c0_i32, %c0_i32_0 : i32, i32
  }
  func.func @transform_2(%arg0: i32) -> (i32, i32) {
    %c0_i32 = arith.constant 0 : i32
    %c0_i32_0 = arith.constant 0 : i32
    %c0_i32_1 = arith.constant 0 : i32
    return %c0_i32, %c0_i32_0 : i32, i32
  }
  func.func @transform_3(%arg0: i32) -> (i32, i32) {
    %c0_i32 = arith.constant 0 : i32
    %c0_i32_0 = arith.constant 0 : i32
    %c0_i32_1 = arith.constant 0 : i32
    return %c0_i32, %c0_i32_0 : i32, i32
  }
  func.func @transform_4(%arg0: i32) -> (i32, i32) {
    %c0_i32 = arith.constant 0 : i32
    %c0_i32_0 = arith.constant 0 : i32
    %c0_i32_1 = arith.constant 0 : i32
    return %c0_i32, %c0_i32_0 : i32, i32
  }
  func.func @transform_5(%arg0: i32) -> (i32, i32, i32) {
    %c0_i32 = arith.constant 0 : i32
    %c0_i32_0 = arith.constant 0 : i32
    %c0_i32_1 = arith.constant 0 : i32
    return %arg0, %c0_i32, %c0_i32_0 : i32, i32, i32
  }
}

</mosaic_0001>

<llo_original>
// kernel: r2p1d_forward.1
$region0: #{r2p1d_forward.1}
  #allocation0 [shape = 'u32[]', space=smem, size = 0x4, offset = 0x4, fixed_abs, tag = 'smem constant byte address 0x4 - core index']
  #allocation1 [shape = 'u32[72,128]{1,0:T(1,128)}', space=vmem, size = 0x9000, scoped, tag = 'internal scratch']
  #allocation2 [shape = 'bf16[96,1024]{1,0:T(8,128)(2,1)}', space=vmem, size = 0x30000, scoped, tag = 'scratch operand']
  %s0 = inlined_call_operand.vmem [shape: bf16[2,288,1024], index: 0, kind: input, shape index: {}]
  %s1 = inlined_call_operand.vmem [shape: bf16[32,288], index: 1, kind: input, shape index: {}]
  %s2 = inlined_call_operand.vmem [shape: f32[32,1], index: 2, kind: input, shape index: {}]
  %s3 = inlined_call_operand.vmem [shape: bf16[32,96], index: 3, kind: input, shape index: {}]
  %s4 = inlined_call_operand.vmem [shape: f32[32,1], index: 4, kind: input, shape index: {}]
  %s5 = inlined_call_operand.vmem [shape: f32[2,32,1024], index: 5, kind: output, shape index: {}]
  %s6 = sld [smem:[#allocation0]]
  $region53: #{r2p1d_forward.1} parent=0
    _
  %s8 = ssub.s32 1, %s6
  %s9 = scalar_select 0, %s8, %s6
  loop: start=0, step=1, limit=4
  $region2: #{r2p1d_forward.1} parent=0 // loop_pre_header
    _
  $region3: #{r2p1d_forward.1} parent=0 // loop_header
    %s11 = sphi 0, %s15
    %p12 = scmp.ge.s32.totalorder %s11, 4
    %s21 = sphi 0, %s23
    %s24 = sphi 0, %s21
    %s25 = sphi 0, %s24
    %s41 = sphi 0, %s25
    %s45 = sphi 0, %s45
    %s47 = sphi 0, %s45
    %s48 = sphi 0, %s47
    %s62 = sphi 0, %s48
    %s66 = sphi 0, %s66
    %s68 = sphi 0, %s66
    %s69 = sphi 0, %s68
    %s83 = sphi 0, %s69
    %s87 = sphi 0, %s87
    %s89 = sphi 0, %s87
    %s90 = sphi 0, %s89
    %s104 = sphi 0, %s90
    %s108 = sphi 0, %s108
    %s110 = sphi 0, %s108
    %s111 = sphi 0, %s110
    %s125 = sphi 0, %s111
    %s131 = sphi 0, %s133
    %s134 = sphi 0, %s131
    %s135 = sphi 0, %s134
    %s151 = sphi 0, %s135
  $region4: #{r2p1d_forward.1} parent=0 // loop_header_branch
    %14 = sbr.rel (%p12) target = $region8
  $region5: #{r2p1d_forward.1} parent=0 // loop_body
    %s16 = ssub.s32 %s11, 1
    %s17 = ssub.s32 %s11, 2
    %s18 = sadd.s32 %s11, 1
    %s19 = ssub.s32 %s11, %s18
    %p20 = scmp.eq.s32.totalorder %s19, 0
    %s22 = sadd.s32 %s21, 1
    %s23 = scalar_select %p20, %s21, %s22
    %p26 = pneg %p20
    %p27 = scmp.eq.s32.totalorder %s11, 1
    %p28 = por %p26, %p27
    %p29 = scmp.ne.s32.totalorder %s21, %s24
    %p30 = scmp.eq.s32.totalorder %s11, 0
    %p31 = por %p29, %p30
    %p32 = scmp.ne.s32.totalorder %s21, %s24
    %p33 = scmp.eq.s32.totalorder %s16, 1
    %p34 = por %p32, %p33
    %p35 = scmp.ne.s32.totalorder %s24, %s25
    %p36 = scmp.eq.s32.totalorder %s16, 0
    %p37 = por %p35, %p36
    %p38 = scmp.ne.s32.totalorder %s24, %s25
    %p39 = scmp.eq.s32.totalorder %s17, 1
    %p40 = por %p38, %p39
    %p42 = scmp.ne.s32.totalorder %s25, %s41
    %p43 = scmp.eq.s32.totalorder %s17, 0
    %p44 = por %p42, %p43
    %s46 = sadd.s32 %s45, 1
    %p49 = scmp.eq.s32.totalorder %s11, 1
    %p50 = scmp.ne.s32.totalorder %s45, %s47
    %p51 = scmp.eq.s32.totalorder %s11, 0
    %p52 = por %p50, %p51
    %p53 = scmp.ne.s32.totalorder %s45, %s47
    %p54 = scmp.eq.s32.totalorder %s16, 1
    %p55 = por %p53, %p54
    %p56 = scmp.ne.s32.totalorder %s47, %s48
    %p57 = scmp.eq.s32.totalorder %s16, 0
    %p58 = por %p56, %p57
    %p59 = scmp.ne.s32.totalorder %s47, %s48
    %p60 = scmp.eq.s32.totalorder %s17, 1
    %p61 = por %p59, %p60
    %p63 = scmp.ne.s32.totalorder %s48, %s62
    %p64 = scmp.eq.s32.totalorder %s17, 0
    %p65 = por %p63, %p64
    %s67 = sadd.s32 %s66, 1
    %p70 = scmp.eq.s32.totalorder %s11, 1
    %p71 = scmp.ne.s32.totalorder %s66, %s68
    %p72 = scmp.eq.s32.totalorder %s11, 0
    %p73 = por %p71, %p72
    %p74 = scmp.ne.s32.totalorder %s66, %s68
    %p75 = scmp.eq.s32.totalorder %s16, 1
    %p76 = por %p74, %p75
    %p77 = scmp.ne.s32.totalorder %s68, %s69
    %p78 = scmp.eq.s32.totalorder %s16, 0
    %p79 = por %p77, %p78
    %p80 = scmp.ne.s32.totalorder %s68, %s69
    %p81 = scmp.eq.s32.totalorder %s17, 1
    %p82 = por %p80, %p81
    %p84 = scmp.ne.s32.totalorder %s69, %s83
    %p85 = scmp.eq.s32.totalorder %s17, 0
    %p86 = por %p84, %p85
    %s88 = sadd.s32 %s87, 1
    %p91 = scmp.eq.s32.totalorder %s11, 1
    %p92 = scmp.ne.s32.totalorder %s87, %s89
    %p93 = scmp.eq.s32.totalorder %s11, 0
    %p94 = por %p92, %p93
    %p95 = scmp.ne.s32.totalorder %s87, %s89
    %p96 = scmp.eq.s32.totalorder %s16, 1
    %p97 = por %p95, %p96
    %p98 = scmp.ne.s32.totalorder %s89, %s90
    %p99 = scmp.eq.s32.totalorder %s16, 0
    %p100 = por %p98, %p99
    %p101 = scmp.ne.s32.totalorder %s89, %s90
    %p102 = scmp.eq.s32.totalorder %s17, 1
    %p103 = por %p101, %p102
    %p105 = scmp.ne.s32.totalorder %s90, %s104
    %p106 = scmp.eq.s32.totalorder %s17, 0
    %p107 = por %p105, %p106
    %s109 = sadd.s32 %s108, 1
    %p112 = scmp.eq.s32.totalorder %s11, 1
    %p113 = scmp.ne.s32.totalorder %s108, %s110
    %p114 = scmp.eq.s32.totalorder %s11, 0
    %p115 = por %p113, %p114
    %p116 = scmp.ne.s32.totalorder %s108, %s110
    %p117 = scmp.eq.s32.totalorder %s16, 1
    %p118 = por %p116, %p117
    %p119 = scmp.ne.s32.totalorder %s110, %s111
    %p120 = scmp.eq.s32.totalorder %s16, 0
    %p121 = por %p119, %p120
    %p122 = scmp.ne.s32.totalorder %s110, %s111
    %p123 = scmp.eq.s32.totalorder %s17, 1
    %p124 = por %p122, %p123
    %p126 = scmp.ne.s32.totalorder %s111, %s125
    %p127 = scmp.eq.s32.totalorder %s17, 0
    %p128 = por %p126, %p127
    %s129 = ssub.s32 %s11, %s18
    %p130 = scmp.eq.s32.totalorder %s129, 0
    %s132 = sadd.s32 %s131, 1
    %s133 = scalar_select %p130, %s131, %s132
    %p136 = pneg %p130
    %p137 = scmp.eq.s32.totalorder %s11, 1
    %p138 = por %p136, %p137
    %p139 = scmp.ne.s32.totalorder %s131, %s134
    %p140 = scmp.eq.s32.totalorder %s11, 0
    %p141 = por %p139, %p140
    %p142 = scmp.ne.s32.totalorder %s131, %s134
    %p143 = scmp.eq.s32.totalorder %s16, 1
    %p144 = por %p142, %p143
    %p145 = scmp.ne.s32.totalorder %s134, %s135
    %p146 = scmp.eq.s32.totalorder %s16, 0
    %p147 = por %p145, %p146
    %p148 = scmp.ne.s32.totalorder %s134, %s135
    %p149 = scmp.eq.s32.totalorder %s17, 1
    %p150 = por %p148, %p149
    %p152 = scmp.ne.s32.totalorder %s135, %s151
    %p153 = scmp.eq.s32.totalorder %s17, 0
    %p154 = por %p152, %p153
    %p155 = scmp.le.s32.totalorder 1, %s11
    %p156 = scmp.lt.s32.totalorder %s11, 3
    %p157 = pnand %p155, %p156
    %p158 = pneg %p157
    // Predicated region
    $region9: #{r2p1d_forward.1} parent=5 // pred_check
      _
    $region10: #{r2p1d_forward.1} parent=5 // pred_check_branch
      %160 = sbr.rel (%p157) target = $region12
    $region11: #{r2p1d_forward.1} parent=5 // pred_region
      %s161 = ssub.s32 %s11, 1
      // Predicated region
      $region13: #{r2p1d_forward.1} parent=11 // pred_check
        %p162 = pneg %p58
      $region14: #{r2p1d_forward.1} parent=11 // pred_check_branch
        %164 = sbr.rel (%p162) target = $region16
      $region15: #{r2p1d_forward.1} parent=11 // pred_region
        _
      $region16: #{r2p1d_forward.1} parent=11 // pred_fallthru
        _
      // Predicated region
      $region17: #{r2p1d_forward.1} parent=11 // pred_check
        %p165 = pneg %p79
      $region18: #{r2p1d_forward.1} parent=11 // pred_check_branch
        %167 = sbr.rel (%p165) target = $region20
      $region19: #{r2p1d_forward.1} parent=11 // pred_region
        _
      $region20: #{r2p1d_forward.1} parent=11 // pred_fallthru
        _
      // Predicated region
      $region21: #{r2p1d_forward.1} parent=11 // pred_check
        %p168 = pneg %p100
      $region22: #{r2p1d_forward.1} parent=11 // pred_check_branch
        %170 = sbr.rel (%p168) target = $region24
      $region23: #{r2p1d_forward.1} parent=11 // pred_region
        _
      $region24: #{r2p1d_forward.1} parent=11 // pred_fallthru
        _
      // Predicated region
      $region25: #{r2p1d_forward.1} parent=11 // pred_check
        %p171 = pneg %p121
      $region26: #{r2p1d_forward.1} parent=11 // pred_check_branch
        %173 = sbr.rel (%p171) target = $region28
      $region27: #{r2p1d_forward.1} parent=11 // pred_region
        _
      $region28: #{r2p1d_forward.1} parent=11 // pred_fallthru
        _
    $region12: #{r2p1d_forward.1} parent=5 // pred_fallthru
      _
    %p174 = scmp.lt.s32.totalorder %s11, 2
    // Predicated region
    $region29: #{r2p1d_forward.1} parent=5 // pred_check
      %p175 = pneg %p174
    $region30: #{r2p1d_forward.1} parent=5 // pred_check_branch
      %177 = sbr.rel (%p175) target = $region32
    $region31: #{r2p1d_forward.1} parent=5 // pred_region
      // Predicated region
      $region33: #{r2p1d_forward.1} parent=31 // pred_check
        %p178 = pneg %p31
      $region34: #{r2p1d_forward.1} parent=31 // pred_check_branch
        %180 = sbr.rel (%p178) target = $region36
      $region35: #{r2p1d_forward.1} parent=31 // pred_region
        %p181 = scmp.lt.s32.totalorder %s11, 1
        %s182 = scalar_select %p181, %s11, 1
        %s183 = smul.addr %s182, 288
        %s184 = smul.addr %s183, 4
        %s185 = scalar_lea.vmem %s0, %s184
      $region36: #{r2p1d_forward.1} parent=31 // pred_fallthru
        _
    $region32: #{r2p1d_forward.1} parent=5 // pred_fallthru
      _
    %p186 = scmp.le.s32.totalorder 1, %s11
    %p187 = scmp.lt.s32.totalorder %s11, 3
    %p188 = pnand %p186, %p187
    %p189 = pneg %p188
    // Predicated region
    $region37: #{r2p1d_forward.1} parent=5 // pred_check
      _
    $region38: #{r2p1d_forward.1} parent=5 // pred_check_branch
      %191 = sbr.rel (%p188) target = $region40
    $region39: #{r2p1d_forward.1} parent=5 // pred_region
      %s192 = ssub.s32 %s11, 1
      %p193 = scmp.lt.s32.totalorder %s16, 1
      %s194 = scalar_select %p193, %s16, 1
      %s195 = smul.addr %s194, 288
      %s196 = smul.addr %s195, 4
      %s197 = scalar_lea.vmem %s0, %s196
      %p198 = pneg %p37
      %p199 = pneg %p34
      %p200 = pneg %p58
      %p201 = pneg %p55
      %p202 = pneg %p79
      %p203 = pneg %p76
      %p204 = pneg %p100
      %p205 = pneg %p97
      %p206 = pneg %p121
      %p207 = pneg %p118
      %p208 = pneg %p147
      %p209 = pneg %p144
      %p210 = scmp.lt.s32.totalorder %s16, 1
      %s211 = scalar_select %p210, %s16, 1
      %s212 = smul.addr %s211, 32
      %s213 = smul.addr %s212, 8
      %s214 = scalar_lea.vmem %s5, %s213
      %p215 = scmp.lt.s32.totalorder %s16, 1
      %s216 = scalar_select %p215, %s16, 1
      %s217 = smul.addr %s216, 288
      %s218 = smul.addr %s217, 4
      %s219 = scalar_lea.vmem %s0, %s218
      %p220 = scmp.lt.s32.totalorder %s16, 1
      %s221 = scalar_select %p220, %s16, 1
      %s222 = smul.addr %s221, 32
      %s223 = smul.addr %s222, 8
      %s224 = scalar_lea.vmem %s5, %s223
      %v226 = vld [vmem:[%s1] sm:$0xff]
      %v227 = vld [vmem:[%s1 + $0x8] sm:$0xf]
      %v228 = vld [vmem:[%s1 + $0xc] sm:$0xff]
      %v229 = vld [vmem:[%s1 + $0x14] sm:$0xf]
      %v230 = vld [vmem:[%s1 + $0x18] sm:$0xff]
      %v231 = vld [vmem:[%s1 + $0x20] sm:$0xf]
      %v232 = vld [vmem:[%s1 + $0x24] sm:$0xff]
      %v233 = vld [vmem:[%s1 + $0x2c] sm:$0xf]
      %v234 = vld [vmem:[%s219] sm:$0xff]
      %v235 = vld [vmem:[%s219 + $0x8] sm:$0xff]
      %v236 = vld [vmem:[%s219 + $0x10] sm:$0xff]
      %v237 = vld [vmem:[%s219 + $0x18] sm:$0xff]
      %v238 = vld [vmem:[%s219 + $0x20] sm:$0xff]
      %v239 = vld [vmem:[%s219 + $0x28] sm:$0xff]
      %v240 = vld [vmem:[%s219 + $0x30] sm:$0xff]
      %v241 = vld [vmem:[%s219 + $0x38] sm:$0xff]
      %v242 = vld [vmem:[%s219 + $0x40] sm:$0xff]
      %v243 = vld [vmem:[%s219 + $0x48] sm:$0xff]
      %v244 = vld [vmem:[%s219 + $0x50] sm:$0xff]
      %v245 = vld [vmem:[%s219 + $0x58] sm:$0xff]
      %v246 = vld [vmem:[%s219 + $0x60] sm:$0xff]
      %v247 = vld [vmem:[%s219 + $0x68] sm:$0xff]
      %v248 = vld [vmem:[%s219 + $0x70] sm:$0xff]
      %v249 = vld [vmem:[%s219 + $0x78] sm:$0xff]
      %v250 = vld [vmem:[%s219 + $0x80] sm:$0xff]
      %v251 = vld [vmem:[%s219 + $0x88] sm:$0xff]
      %v252 = vld [vmem:[%s219 + $0x90] sm:$0xff]
      %v253 = vld [vmem:[%s219 + $0x98] sm:$0xff]
      %v254 = vld [vmem:[%s219 + $0xa0] sm:$0xff]
      %v255 = vld [vmem:[%s219 + $0xa8] sm:$0xff]
      %v256 = vld [vmem:[%s219 + $0xb0] sm:$0xff]
      %v257 = vld [vmem:[%s219 + $0xb8] sm:$0xff]
      %v258 = vld [vmem:[%s219 + $0xc0] sm:$0xff]
      %v259 = vld [vmem:[%s219 + $0xc8] sm:$0xff]
      %v260 = vld [vmem:[%s219 + $0xd0] sm:$0xff]
      %v261 = vld [vmem:[%s219 + $0xd8] sm:$0xff]
      %v262 = vld [vmem:[%s219 + $0xe0] sm:$0xff]
      %v263 = vld [vmem:[%s219 + $0xe8] sm:$0xff]
      %v264 = vld [vmem:[%s219 + $0xf0] sm:$0xff]
      %v265 = vld [vmem:[%s219 + $0xf8] sm:$0xff]
      %v266 = vld [vmem:[%s219 + $0x100] sm:$0xff]
      %v267 = vld [vmem:[%s219 + $0x108] sm:$0xff]
      %v268 = vld [vmem:[%s219 + $0x110] sm:$0xff]
      %v269 = vld [vmem:[%s219 + $0x118] sm:$0xff]
      %v270 = vld [vmem:[%s219 + $0x120] sm:$0xff]
      %v271 = vld [vmem:[%s219 + $0x128] sm:$0xff]
      %v272 = vld [vmem:[%s219 + $0x130] sm:$0xff]
      %v273 = vld [vmem:[%s219 + $0x138] sm:$0xff]
      %v274 = vld [vmem:[%s219 + $0x140] sm:$0xff]
      %v275 = vld [vmem:[%s219 + $0x148] sm:$0xff]
      %v276 = vld [vmem:[%s219 + $0x150] sm:$0xff]
      %v277 = vld [vmem:[%s219 + $0x158] sm:$0xff]
      %v278 = vld [vmem:[%s219 + $0x160] sm:$0xff]
      %v279 = vld [vmem:[%s219 + $0x168] sm:$0xff]
      %v280 = vld [vmem:[%s219 + $0x170] sm:$0xff]
      %v281 = vld [vmem:[%s219 + $0x178] sm:$0xff]
      %v282 = vld [vmem:[%s219 + $0x180] sm:$0xff]
      %v283 = vld [vmem:[%s219 + $0x188] sm:$0xff]
      %v284 = vld [vmem:[%s219 + $0x190] sm:$0xff]
      %v285 = vld [vmem:[%s219 + $0x198] sm:$0xff]
      %v286 = vld [vmem:[%s219 + $0x1a0] sm:$0xff]
      %v287 = vld [vmem:[%s219 + $0x1a8] sm:$0xff]
      %v288 = vld [vmem:[%s219 + $0x1b0] sm:$0xff]
      %v289 = vld [vmem:[%s219 + $0x1b8] sm:$0xff]
      %v290 = vld [vmem:[%s219 + $0x1c0] sm:$0xff]
      %v291 = vld [vmem:[%s219 + $0x1c8] sm:$0xff]
      %v292 = vld [vmem:[%s219 + $0x1d0] sm:$0xff]
      %v293 = vld [vmem:[%s219 + $0x1d8] sm:$0xff]
      %v294 = vld [vmem:[%s219 + $0x1e0] sm:$0xff]
      %v295 = vld [vmem:[%s219 + $0x1e8] sm:$0xff]
      %v296 = vld [vmem:[%s219 + $0x1f0] sm:$0xff]
      %v297 = vld [vmem:[%s219 + $0x1f8] sm:$0xff]
      %v298 = vld [vmem:[%s219 + $0x200] sm:$0xff]
      %v299 = vld [vmem:[%s219 + $0x208] sm:$0xff]
      %v300 = vld [vmem:[%s219 + $0x210] sm:$0xff]
      %v301 = vld [vmem:[%s219 + $0x218] sm:$0xff]
      %v302 = vld [vmem:[%s219 + $0x220] sm:$0xff]
      %v303 = vld [vmem:[%s219 + $0x228] sm:$0xff]
      %v304 = vld [vmem:[%s219 + $0x230] sm:$0xff]
      %v305 = vld [vmem:[%s219 + $0x238] sm:$0xff]
      %v306 = vld [vmem:[%s219 + $0x240] sm:$0xff]
      %v307 = vld [vmem:[%s219 + $0x248] sm:$0xff]
      %v308 = vld [vmem:[%s219 + $0x250] sm:$0xff]
      %v309 = vld [vmem:[%s219 + $0x258] sm:$0xff]
      %v310 = vld [vmem:[%s219 + $0x260] sm:$0xff]
      %v311 = vld [vmem:[%s219 + $0x268] sm:$0xff]
      %v312 = vld [vmem:[%s219 + $0x270] sm:$0xff]
      %v313 = vld [vmem:[%s219 + $0x278] sm:$0xff]
      %v314 = vld [vmem:[%s219 + $0x280] sm:$0xff]
      %v315 = vld [vmem:[%s219 + $0x288] sm:$0xff]
      %v316 = vld [vmem:[%s219 + $0x290] sm:$0xff]
      %v317 = vld [vmem:[%s219 + $0x298] sm:$0xff]
      %v318 = vld [vmem:[%s219 + $0x2a0] sm:$0xff]
      %v319 = vld [vmem:[%s219 + $0x2a8] sm:$0xff]
      %v320 = vld [vmem:[%s219 + $0x2b0] sm:$0xff]
      %v321 = vld [vmem:[%s219 + $0x2b8] sm:$0xff]
      %v322 = vld [vmem:[%s219 + $0x2c0] sm:$0xff]
      %v323 = vld [vmem:[%s219 + $0x2c8] sm:$0xff]
      %v324 = vld [vmem:[%s219 + $0x2d0] sm:$0xff]
      %v325 = vld [vmem:[%s219 + $0x2d8] sm:$0xff]
      %v326 = vld [vmem:[%s219 + $0x2e0] sm:$0xff]
      %v327 = vld [vmem:[%s219 + $0x2e8] sm:$0xff]
      %v328 = vld [vmem:[%s219 + $0x2f0] sm:$0xff]
      %v329 = vld [vmem:[%s219 + $0x2f8] sm:$0xff]
      %v330 = vld [vmem:[%s219 + $0x300] sm:$0xff]
      %v331 = vld [vmem:[%s219 + $0x308] sm:$0xff]
      %v332 = vld [vmem:[%s219 + $0x310] sm:$0xff]
      %v333 = vld [vmem:[%s219 + $0x318] sm:$0xff]
      %v334 = vld [vmem:[%s219 + $0x320] sm:$0xff]
      %v335 = vld [vmem:[%s219 + $0x328] sm:$0xff]
      %v336 = vld [vmem:[%s219 + $0x330] sm:$0xff]
      %v337 = vld [vmem:[%s219 + $0x338] sm:$0xff]
      %v338 = vld [vmem:[%s219 + $0x340] sm:$0xff]
      %v339 = vld [vmem:[%s219 + $0x348] sm:$0xff]
      %v340 = vld [vmem:[%s219 + $0x350] sm:$0xff]
      %v341 = vld [vmem:[%s219 + $0x358] sm:$0xff]
      %v342 = vld [vmem:[%s219 + $0x360] sm:$0xff]
      %v343 = vld [vmem:[%s219 + $0x368] sm:$0xff]
      %v344 = vld [vmem:[%s219 + $0x370] sm:$0xff]
      %v345 = vld [vmem:[%s219 + $0x378] sm:$0xff]
      %v346 = vld [vmem:[%s219 + $0x380] sm:$0xff]
      %v347 = vld [vmem:[%s219 + $0x388] sm:$0xff]
      %v348 = vld [vmem:[%s219 + $0x390] sm:$0xff]
      %v349 = vld [vmem:[%s219 + $0x398] sm:$0xff]
      %v350 = vld [vmem:[%s219 + $0x3a0] sm:$0xff]
      %v351 = vld [vmem:[%s219 + $0x3a8] sm:$0xff]
      %v352 = vld [vmem:[%s219 + $0x3b0] sm:$0xff]
      %v353 = vld [vmem:[%s219 + $0x3b8] sm:$0xff]
      %v354 = vld [vmem:[%s219 + $0x3c0] sm:$0xff]
      %v355 = vld [vmem:[%s219 + $0x3c8] sm:$0xff]
      %v356 = vld [vmem:[%s219 + $0x3d0] sm:$0xff]
      %v357 = vld [vmem:[%s219 + $0x3d8] sm:$0xff]
      %v358 = vld [vmem:[%s219 + $0x3e0] sm:$0xff]
      %v359 = vld [vmem:[%s219 + $0x3e8] sm:$0xff]
      %v360 = vld [vmem:[%s219 + $0x3f0] sm:$0xff]
      %v361 = vld [vmem:[%s219 + $0x3f8] sm:$0xff]
      %v362 = vld [vmem:[%s219 + $0x400] sm:$0xff]
      %v363 = vld [vmem:[%s219 + $0x408] sm:$0xff]
      %v364 = vld [vmem:[%s219 + $0x410] sm:$0xff]
      %v365 = vld [vmem:[%s219 + $0x418] sm:$0xff]
      %v366 = vld [vmem:[%s219 + $0x420] sm:$0xff]
      %v367 = vld [vmem:[%s219 + $0x428] sm:$0xff]
      %v368 = vld [vmem:[%s219 + $0x430] sm:$0xff]
      %v369 = vld [vmem:[%s219 + $0x438] sm:$0xff]
      %v370 = vld [vmem:[%s219 + $0x440] sm:$0xff]
      %v371 = vld [vmem:[%s219 + $0x448] sm:$0xff]
      %v372 = vld [vmem:[%s219 + $0x450] sm:$0xff]
      %v373 = vld [vmem:[%s219 + $0x458] sm:$0xff]
      %v374 = vld [vmem:[%s219 + $0x460] sm:$0xff]
      %v375 = vld [vmem:[%s219 + $0x468] sm:$0xff]
      %v376 = vld [vmem:[%s219 + $0x470] sm:$0xff]
      %v377 = vld [vmem:[%s219 + $0x478] sm:$0xff]
      %v378 = vld [vmem:[%s2] sm:$0xff]
      %v379 = vld [vmem:[%s2 + $0x8] sm:$0xff]
      %v380 = vld [vmem:[%s2 + $0x10] sm:$0xff]
      %v381 = vld [vmem:[%s2 + $0x18] sm:$0xff]
      %383 = vset.pattern.permute.xlu0 0
      %384 = vperm.xlu0 %383, %v378
      %v385 = vpop.permute.xlu0 %384
      %388 = vset.pattern.permute.xlu0 0
      %389 = vperm.xlu0 %388, %v379
      %v390 = vpop.permute.xlu0 %389
      %393 = vset.pattern.permute.xlu0 0
      %394 = vperm.xlu0 %393, %v380
      %v395 = vpop.permute.xlu0 %394
      %398 = vset.pattern.permute.xlu0 0
      %399 = vperm.xlu0 %398, %v381
      %v400 = vpop.permute.xlu0 %399
      %v410 = vunpack.c.l.b16 %v226
      %v411 = vunpack.c.h.b16 %v226
      %v412 = vunpack.c.l.b16 %v227
      %v413 = vunpack.c.l.b16 %v228
      %v414 = vunpack.c.h.b16 %v228
      %v415 = vunpack.c.l.b16 %v229
      %v416 = vunpack.c.l.b16 %v230
      %v417 = vunpack.c.h.b16 %v230
      %v418 = vunpack.c.l.b16 %v231
      %v419 = vunpack.c.l.b16 %v232
      %v420 = vunpack.c.h.b16 %v232
      %v421 = vunpack.c.l.b16 %v233
      %v422 = vpack.c.b16 %v413, %v410
      %v423 = vpack.c.b16 %v414, %v411
      %v424 = vpack.c.b16 %v415, %v412
      %v425 = vpack.c.b16 %v419, %v416
      %v426 = vpack.c.b16 %v420, %v417
      %v427 = vpack.c.b16 %v421, %v418
      %v576 = vunpack.c.l.b16 %v234
      %v577 = vunpack.c.h.b16 %v234
      %v578 = vunpack.c.l.b16 %v235
      %v579 = vunpack.c.h.b16 %v235
      %v580 = vunpack.c.l.b16 %v236
      %v581 = vunpack.c.h.b16 %v236
      %v582 = vunpack.c.l.b16 %v237
      %v583 = vunpack.c.h.b16 %v237
      %v584 = vunpack.c.l.b16 %v238
      %v585 = vunpack.c.h.b16 %v238
      %v586 = vunpack.c.l.b16 %v239
      %v587 = vunpack.c.h.b16 %v239
      %v588 = vunpack.c.l.b16 %v240
      %v589 = vunpack.c.h.b16 %v240
      %v590 = vunpack.c.l.b16 %v241
      %v591 = vunpack.c.h.b16 %v241
      %v592 = vunpack.c.l.b16 %v242
      %v593 = vunpack.c.h.b16 %v242
      %v594 = vunpack.c.l.b16 %v243
      %v595 = vunpack.c.h.b16 %v243
      %v596 = vunpack.c.l.b16 %v244
      %v597 = vunpack.c.h.b16 %v244
      %v598 = vunpack.c.l.b16 %v245
      %v599 = vunpack.c.h.b16 %v245
      %v600 = vunpack.c.l.b16 %v246
      %v601 = vunpack.c.h.b16 %v246
      %v602 = vunpack.c.l.b16 %v247
      %v603 = vunpack.c.h.b16 %v247
      %v604 = vunpack.c.l.b16 %v248
      %v605 = vunpack.c.h.b16 %v248
      %v606 = vunpack.c.l.b16 %v249
      %v607 = vunpack.c.h.b16 %v249
      %v608 = vunpack.c.l.b16 %v250
      %v609 = vunpack.c.h.b16 %v250
      %v610 = vunpack.c.l.b16 %v251
      %v611 = vunpack.c.h.b16 %v251
      %v612 = vunpack.c.l.b16 %v252
      %v613 = vunpack.c.h.b16 %v252
      %v614 = vunpack.c.l.b16 %v253
      %v615 = vunpack.c.h.b16 %v253
      %v616 = vunpack.c.l.b16 %v254
      %v617 = vunpack.c.h.b16 %v254
      %v618 = vunpack.c.l.b16 %v255
      %v619 = vunpack.c.h.b16 %v255
      %v620 = vunpack.c.l.b16 %v256
      %v621 = vunpack.c.h.b16 %v256
      %v622 = vunpack.c.l.b16 %v257
      %v623 = vunpack.c.h.b16 %v257
      %v624 = vunpack.c.l.b16 %v258
      %v625 = vunpack.c.h.b16 %v258
      %v626 = vunpack.c.l.b16 %v259
      %v627 = vunpack.c.h.b16 %v259
      %v628 = vunpack.c.l.b16 %v260
      %v629 = vunpack.c.h.b16 %v260
      %v630 = vunpack.c.l.b16 %v261
      %v631 = vunpack.c.h.b16 %v261
      %v632 = vunpack.c.l.b16 %v262
      %v633 = vunpack.c.h.b16 %v262
      %v634 = vunpack.c.l.b16 %v263
      %v635 = vunpack.c.h.b16 %v263
      %v636 = vunpack.c.l.b16 %v264
      %v637 = vunpack.c.h.b16 %v264
      %v638 = vunpack.c.l.b16 %v265
      %v639 = vunpack.c.h.b16 %v265
      %v640 = vunpack.c.l.b16 %v266
      %v641 = vunpack.c.h.b16 %v266
      %v642 = vunpack.c.l.b16 %v267
      %v643 = vunpack.c.h.b16 %v267
      %v644 = vunpack.c.l.b16 %v268
      %v645 = vunpack.c.h.b16 %v268
      %v646 = vunpack.c.l.b16 %v269
      %v647 = vunpack.c.h.b16 %v269
      %v648 = vunpack.c.l.b16 %v270
      %v649 = vunpack.c.h.b16 %v270
      %v650 = vunpack.c.l.b16 %v271
      %v651 = vunpack.c.h.b16 %v271
      %v652 = vunpack.c.l.b16 %v272
      %v653 = vunpack.c.h.b16 %v272
      %v654 = vunpack.c.l.b16 %v273
      %v655 = vunpack.c.h.b16 %v273
      %v656 = vunpack.c.l.b16 %v274
      %v657 = vunpack.c.h.b16 %v274
      %v658 = vunpack.c.l.b16 %v275
      %v659 = vunpack.c.h.b16 %v275
      %v660 = vunpack.c.l.b16 %v276
      %v661 = vunpack.c.h.b16 %v276
      %v662 = vunpack.c.l.b16 %v277
      %v663 = vunpack.c.h.b16 %v277
      %v664 = vunpack.c.l.b16 %v278
      %v665 = vunpack.c.h.b16 %v278
      %v666 = vunpack.c.l.b16 %v279
      %v667 = vunpack.c.h.b16 %v279
      %v668 = vunpack.c.l.b16 %v280
      %v669 = vunpack.c.h.b16 %v280
      %v670 = vunpack.c.l.b16 %v281
      %v671 = vunpack.c.h.b16 %v281
      %v672 = vunpack.c.l.b16 %v282
      %v673 = vunpack.c.h.b16 %v282
      %v674 = vunpack.c.l.b16 %v283
      %v675 = vunpack.c.h.b16 %v283
      %v676 = vunpack.c.l.b16 %v284
      %v677 = vunpack.c.h.b16 %v284
      %v678 = vunpack.c.l.b16 %v285
      %v679 = vunpack.c.h.b16 %v285
      %v680 = vunpack.c.l.b16 %v286
      %v681 = vunpack.c.h.b16 %v286
      %v682 = vunpack.c.l.b16 %v287
      %v683 = vunpack.c.h.b16 %v287
      %v684 = vunpack.c.l.b16 %v288
      %v685 = vunpack.c.h.b16 %v288
      %v686 = vunpack.c.l.b16 %v289
      %v687 = vunpack.c.h.b16 %v289
      %v688 = vunpack.c.l.b16 %v290
      %v689 = vunpack.c.h.b16 %v290
      %v690 = vunpack.c.l.b16 %v291
      %v691 = vunpack.c.h.b16 %v291
      %v692 = vunpack.c.l.b16 %v292
      %v693 = vunpack.c.h.b16 %v292
      %v694 = vunpack.c.l.b16 %v293
      %v695 = vunpack.c.h.b16 %v293
      %v696 = vunpack.c.l.b16 %v294
      %v697 = vunpack.c.h.b16 %v294
      %v698 = vunpack.c.l.b16 %v295
      %v699 = vunpack.c.h.b16 %v295
      %v700 = vunpack.c.l.b16 %v296
      %v701 = vunpack.c.h.b16 %v296
      %v702 = vunpack.c.l.b16 %v297
      %v703 = vunpack.c.h.b16 %v297
      %v704 = vunpack.c.l.b16 %v298
      %v705 = vunpack.c.h.b16 %v298
      %v706 = vunpack.c.l.b16 %v299
      %v707 = vunpack.c.h.b16 %v299
      %v708 = vunpack.c.l.b16 %v300
      %v709 = vunpack.c.h.b16 %v300
      %v710 = vunpack.c.l.b16 %v301
      %v711 = vunpack.c.h.b16 %v301
      %v712 = vunpack.c.l.b16 %v302
      %v713 = vunpack.c.h.b16 %v302
      %v714 = vunpack.c.l.b16 %v303
      %v715 = vunpack.c.h.b16 %v303
      %v716 = vunpack.c.l.b16 %v304
      %v717 = vunpack.c.h.b16 %v304
      %v718 = vunpack.c.l.b16 %v305
      %v719 = vunpack.c.h.b16 %v305
      %v720 = vunpack.c.l.b16 %v306
      %v721 = vunpack.c.h.b16 %v306
      %v722 = vunpack.c.l.b16 %v307
      %v723 = vunpack.c.h.b16 %v307
      %v724 = vunpack.c.l.b16 %v308
      %v725 = vunpack.c.h.b16 %v308
      %v726 = vunpack.c.l.b16 %v309
      %v727 = vunpack.c.h.b16 %v309
      %v728 = vunpack.c.l.b16 %v310
      %v729 = vunpack.c.h.b16 %v310
      %v730 = vunpack.c.l.b16 %v311
      %v731 = vunpack.c.h.b16 %v311
      %v732 = vunpack.c.l.b16 %v312
      %v733 = vunpack.c.h.b16 %v312
      %v734 = vunpack.c.l.b16 %v313
      %v735 = vunpack.c.h.b16 %v313
      %v736 = vunpack.c.l.b16 %v314
      %v737 = vunpack.c.h.b16 %v314
      %v738 = vunpack.c.l.b16 %v315
      %v739 = vunpack.c.h.b16 %v315
      %v740 = vunpack.c.l.b16 %v316
      %v741 = vunpack.c.h.b16 %v316
      %v742 = vunpack.c.l.b16 %v317
      %v743 = vunpack.c.h.b16 %v317
      %v744 = vunpack.c.l.b16 %v318
      %v745 = vunpack.c.h.b16 %v318
      %v746 = vunpack.c.l.b16 %v319
      %v747 = vunpack.c.h.b16 %v319
      %v748 = vunpack.c.l.b16 %v320
      %v749 = vunpack.c.h.b16 %v320
      %v750 = vunpack.c.l.b16 %v321
      %v751 = vunpack.c.h.b16 %v321
      %v752 = vunpack.c.l.b16 %v322
      %v753 = vunpack.c.h.b16 %v322
      %v754 = vunpack.c.l.b16 %v323
      %v755 = vunpack.c.h.b16 %v323
      %v756 = vunpack.c.l.b16 %v324
      %v757 = vunpack.c.h.b16 %v324
      %v758 = vunpack.c.l.b16 %v325
      %v759 = vunpack.c.h.b16 %v325
      %v760 = vunpack.c.l.b16 %v326
      %v761 = vunpack.c.h.b16 %v326
      %v762 = vunpack.c.l.b16 %v327
      %v763 = vunpack.c.h.b16 %v327
      %v764 = vunpack.c.l.b16 %v328
      %v765 = vunpack.c.h.b16 %v328
      %v766 = vunpack.c.l.b16 %v329
      %v767 = vunpack.c.h.b16 %v329
      %v768 = vunpack.c.l.b16 %v330
      %v769 = vunpack.c.h.b16 %v330
      %v770 = vunpack.c.l.b16 %v331
      %v771 = vunpack.c.h.b16 %v331
      %v772 = vunpack.c.l.b16 %v332
      %v773 = vunpack.c.h.b16 %v332
      %v774 = vunpack.c.l.b16 %v333
      %v775 = vunpack.c.h.b16 %v333
      %v776 = vunpack.c.l.b16 %v334
      %v777 = vunpack.c.h.b16 %v334
      %v778 = vunpack.c.l.b16 %v335
      %v779 = vunpack.c.h.b16 %v335
      %v780 = vunpack.c.l.b16 %v336
      %v781 = vunpack.c.h.b16 %v336
      %v782 = vunpack.c.l.b16 %v337
      %v783 = vunpack.c.h.b16 %v337
      %v784 = vunpack.c.l.b16 %v338
      %v785 = vunpack.c.h.b16 %v338
      %v786 = vunpack.c.l.b16 %v339
      %v787 = vunpack.c.h.b16 %v339
      %v788 = vunpack.c.l.b16 %v340
      %v789 = vunpack.c.h.b16 %v340
      %v790 = vunpack.c.l.b16 %v341
      %v791 = vunpack.c.h.b16 %v341
      %v792 = vunpack.c.l.b16 %v342
      %v793 = vunpack.c.h.b16 %v342
      %v794 = vunpack.c.l.b16 %v343
      %v795 = vunpack.c.h.b16 %v343
      %v796 = vunpack.c.l.b16 %v344
      %v797 = vunpack.c.h.b16 %v344
      %v798 = vunpack.c.l.b16 %v345
      %v799 = vunpack.c.h.b16 %v345
      %v800 = vunpack.c.l.b16 %v346
      %v801 = vunpack.c.h.b16 %v346
      %v802 = vunpack.c.l.b16 %v347
      %v803 = vunpack.c.h.b16 %v347
      %v804 = vunpack.c.l.b16 %v348
      %v805 = vunpack.c.h.b16 %v348
      %v806 = vunpack.c.l.b16 %v349
      %v807 = vunpack.c.h.b16 %v349
      %v808 = vunpack.c.l.b16 %v350
      %v809 = vunpack.c.h.b16 %v350
      %v810 = vunpack.c.l.b16 %v351
      %v811 = vunpack.c.h.b16 %v351
      %v812 = vunpack.c.l.b16 %v352
      %v813 = vunpack.c.h.b16 %v352
      %v814 = vunpack.c.l.b16 %v353
      %v815 = vunpack.c.h.b16 %v353
      %v816 = vunpack.c.l.b16 %v354
      %v817 = vunpack.c.h.b16 %v354
      %v818 = vunpack.c.l.b16 %v355
      %v819 = vunpack.c.h.b16 %v355
      %v820 = vunpack.c.l.b16 %v356
      %v821 = vunpack.c.h.b16 %v356
      %v822 = vunpack.c.l.b16 %v357
      %v823 = vunpack.c.h.b16 %v357
      %v824 = vunpack.c.l.b16 %v358
      %v825 = vunpack.c.h.b16 %v358
      %v826 = vunpack.c.l.b16 %v359
      %v827 = vunpack.c.h.b16 %v359
      %v828 = vunpack.c.l.b16 %v360
      %v829 = vunpack.c.h.b16 %v360
      %v830 = vunpack.c.l.b16 %v361
      %v831 = vunpack.c.h.b16 %v361
      %v832 = vunpack.c.l.b16 %v362
      %v833 = vunpack.c.h.b16 %v362
      %v834 = vunpack.c.l.b16 %v363
      %v835 = vunpack.c.h.b16 %v363
      %v836 = vunpack.c.l.b16 %v364
      %v837 = vunpack.c.h.b16 %v364
      %v838 = vunpack.c.l.b16 %v365
      %v839 = vunpack.c.h.b16 %v365
      %v840 = vunpack.c.l.b16 %v366
      %v841 = vunpack.c.h.b16 %v366
      %v842 = vunpack.c.l.b16 %v367
      %v843 = vunpack.c.h.b16 %v367
      %v844 = vunpack.c.l.b16 %v368
      %v845 = vunpack.c.h.b16 %v368
      %v846 = vunpack.c.l.b16 %v369
      %v847 = vunpack.c.h.b16 %v369
      %v848 = vunpack.c.l.b16 %v370
      %v849 = vunpack.c.h.b16 %v370
      %v850 = vunpack.c.l.b16 %v371
      %v851 = vunpack.c.h.b16 %v371
      %v852 = vunpack.c.l.b16 %v372
      %v853 = vunpack.c.h.b16 %v372
      %v854 = vunpack.c.l.b16 %v373
      %v855 = vunpack.c.h.b16 %v373
      %v856 = vunpack.c.l.b16 %v374
      %v857 = vunpack.c.h.b16 %v374
      %v858 = vunpack.c.l.b16 %v375
      %v859 = vunpack.c.h.b16 %v375
      %v860 = vunpack.c.l.b16 %v376
      %v861 = vunpack.c.h.b16 %v376
      %v862 = vunpack.c.l.b16 %v377
      %v863 = vunpack.c.h.b16 %v377
      %v864 = vpack.c.b16 %v584, %v576
      %v865 = vpack.c.b16 %v585, %v577
      %v866 = vpack.c.b16 %v586, %v578
      %v867 = vpack.c.b16 %v587, %v579
      %v868 = vpack.c.b16 %v588, %v580
      %v869 = vpack.c.b16 %v589, %v581
      %v870 = vpack.c.b16 %v590, %v582
      %v871 = vpack.c.b16 %v591, %v583
      %v872 = vpack.c.b16 %v600, %v592
      %v873 = vpack.c.b16 %v601, %v593
      %v874 = vpack.c.b16 %v602, %v594
      %v875 = vpack.c.b16 %v603, %v595
      %v876 = vpack.c.b16 %v604, %v596
      %v877 = vpack.c.b16 %v605, %v597
      %v878 = vpack.c.b16 %v606, %v598
      %v879 = vpack.c.b16 %v607, %v599
      %v880 = vpack.c.b16 %v616, %v608
      %v881 = vpack.c.b16 %v617, %v609
      %v882 = vpack.c.b16 %v618, %v610
      %v883 = vpack.c.b16 %v619, %v611
      %v884 = vpack.c.b16 %v620, %v612
      %v885 = vpack.c.b16 %v621, %v613
      %v886 = vpack.c.b16 %v622, %v614
      %v887 = vpack.c.b16 %v623, %v615
      %v888 = vpack.c.b16 %v632, %v624
      %v889 = vpack.c.b16 %v633, %v625
      %v890 = vpack.c.b16 %v634, %v626
      %v891 = vpack.c.b16 %v635, %v627
      %v892 = vpack.c.b16 %v636, %v628
      %v893 = vpack.c.b16 %v637, %v629
      %v894 = vpack.c.b16 %v638, %v630
      %v895 = vpack.c.b16 %v639, %v631
      %v896 = vpack.c.b16 %v648, %v640
      %v897 = vpack.c.b16 %v649, %v641
      %v898 = vpack.c.b16 %v650, %v642
      %v899 = vpack.c.b16 %v651, %v643
      %v900 = vpack.c.b16 %v652, %v644
      %v901 = vpack.c.b16 %v653, %v645
      %v902 = vpack.c.b16 %v654, %v646
      %v903 = vpack.c.b16 %v655, %v647
      %v904 = vpack.c.b16 %v664, %v656
      %v905 = vpack.c.b16 %v665, %v657
      %v906 = vpack.c.b16 %v666, %v658
      %v907 = vpack.c.b16 %v667, %v659
      %v908 = vpack.c.b16 %v668, %v660
      %v909 = vpack.c.b16 %v669, %v661
      %v910 = vpack.c.b16 %v670, %v662
      %v911 = vpack.c.b16 %v671, %v663
      %v912 = vpack.c.b16 %v680, %v672
      %v913 = vpack.c.b16 %v681, %v673
      %v914 = vpack.c.b16 %v682, %v674
      %v915 = vpack.c.b16 %v683, %v675
      %v916 = vpack.c.b16 %v684, %v676
      %v917 = vpack.c.b16 %v685, %v677
      %v918 = vpack.c.b16 %v686, %v678
      %v919 = vpack.c.b16 %v687, %v679
      %v920 = vpack.c.b16 %v696, %v688
      %v921 = vpack.c.b16 %v697, %v689
      %v922 = vpack.c.b16 %v698, %v690
      %v923 = vpack.c.b16 %v699, %v691
      %v924 = vpack.c.b16 %v700, %v692
      %v925 = vpack.c.b16 %v701, %v693
      %v926 = vpack.c.b16 %v702, %v694
      %v927 = vpack.c.b16 %v703, %v695
      %v928 = vpack.c.b16 %v712, %v704
      %v929 = vpack.c.b16 %v713, %v705
      %v930 = vpack.c.b16 %v714, %v706
      %v931 = vpack.c.b16 %v715, %v707
      %v932 = vpack.c.b16 %v716, %v708
      %v933 = vpack.c.b16 %v717, %v709
      %v934 = vpack.c.b16 %v718, %v710
      %v935 = vpack.c.b16 %v719, %v711
      %v936 = vpack.c.b16 %v728, %v720
      %v937 = vpack.c.b16 %v729, %v721
      %v938 = vpack.c.b16 %v730, %v722
      %v939 = vpack.c.b16 %v731, %v723
      %v940 = vpack.c.b16 %v732, %v724
      %v941 = vpack.c.b16 %v733, %v725
      %v942 = vpack.c.b16 %v734, %v726
      %v943 = vpack.c.b16 %v735, %v727
      %v944 = vpack.c.b16 %v744, %v736
      %v945 = vpack.c.b16 %v745, %v737
      %v946 = vpack.c.b16 %v746, %v738
      %v947 = vpack.c.b16 %v747, %v739
      %v948 = vpack.c.b16 %v748, %v740
      %v949 = vpack.c.b16 %v749, %v741
      %v950 = vpack.c.b16 %v750, %v742
      %v951 = vpack.c.b16 %v751, %v743
      %v952 = vpack.c.b16 %v760, %v752
      %v953 = vpack.c.b16 %v761, %v753
      %v954 = vpack.c.b16 %v762, %v754
      %v955 = vpack.c.b16 %v763, %v755
      %v956 = vpack.c.b16 %v764, %v756
      %v957 = vpack.c.b16 %v765, %v757
      %v958 = vpack.c.b16 %v766, %v758
      %v959 = vpack.c.b16 %v767, %v759
      %v960 = vpack.c.b16 %v776, %v768
      %v961 = vpack.c.b16 %v777, %v769
      %v962 = vpack.c.b16 %v778, %v770
      %v963 = vpack.c.b16 %v779, %v771
      %v964 = vpack.c.b16 %v780, %v772
      %v965 = vpack.c.b16 %v781, %v773
      %v966 = vpack.c.b16 %v782, %v774
      %v967 = vpack.c.b16 %v783, %v775
      %v968 = vpack.c.b16 %v792, %v784
      %v969 = vpack.c.b16 %v793, %v785
      %v970 = vpack.c.b16 %v794, %v786
      %v971 = vpack.c.b16 %v795, %v787
      %v972 = vpack.c.b16 %v796, %v788
      %v973 = vpack.c.b16 %v797, %v789
      %v974 = vpack.c.b16 %v798, %v790
      %v975 = vpack.c.b16 %v799, %v791
      %v976 = vpack.c.b16 %v808, %v800
      %v977 = vpack.c.b16 %v809, %v801
      %v978 = vpack.c.b16 %v810, %v802
      %v979 = vpack.c.b16 %v811, %v803
      %v980 = vpack.c.b16 %v812, %v804
      %v981 = vpack.c.b16 %v813, %v805
      %v982 = vpack.c.b16 %v814, %v806
      %v983 = vpack.c.b16 %v815, %v807
      %v984 = vpack.c.b16 %v824, %v816
      %v985 = vpack.c.b16 %v825, %v817
      %v986 = vpack.c.b16 %v826, %v818
      %v987 = vpack.c.b16 %v827, %v819
      %v988 = vpack.c.b16 %v828, %v820
      %v989 = vpack.c.b16 %v829, %v821
      %v990 = vpack.c.b16 %v830, %v822
      %v991 = vpack.c.b16 %v831, %v823
      %v992 = vpack.c.b16 %v840, %v832
      %v993 = vpack.c.b16 %v841, %v833
      %v994 = vpack.c.b16 %v842, %v834
      %v995 = vpack.c.b16 %v843, %v835
      %v996 = vpack.c.b16 %v844, %v836
      %v997 = vpack.c.b16 %v845, %v837
      %v998 = vpack.c.b16 %v846, %v838
      %v999 = vpack.c.b16 %v847, %v839
      %v1000 = vpack.c.b16 %v856, %v848
      %v1001 = vpack.c.b16 %v857, %v849
      %v1002 = vpack.c.b16 %v858, %v850
      %v1003 = vpack.c.b16 %v859, %v851
      %v1004 = vpack.c.b16 %v860, %v852
      %v1005 = vpack.c.b16 %v861, %v853
      %v1006 = vpack.c.b16 %v862, %v854
      %v1007 = vpack.c.b16 %v863, %v855
      %vm1152 = vcmask 261120
      %v1154 = vsel %vm1152, %v424, 0
      %v1157 = vsel %vm1152, %v427, 0
      %1159 = vmatpush.bf16.msra.mxu0 %v920
      %1160 = vmatpush.bf16.msra.mxu0 %v912
      %1161 = vmatpush.bf16.msra.mxu0 %v904
      %1162 = vmatpush.bf16.msra.mxu0 %v896
      %1163 = vmatpush.bf16.msra.mxu0 %v888
      %1164 = vmatpush.bf16.msra.mxu0 %v880
      %1165 = vmatpush.bf16.msra.mxu0 %v872
      %1166 = vmatpush.bf16.msra.mxu0 %v864
      %1167 = vmatmul.bf16.gmra.mxu0 %v422
      %v1168 = vpop.f32.mrf.mxu0
      %v1169 = vadd.f32 %v385, %v1168
      %v1170 = vpop.f32.mrf.mxu0
      %v1171 = vadd.f32 %v390, %v1170
      %1172 = vmatmul.bf16.gmra.mxu0 %v425
      %v1173 = vpop.f32.mrf.mxu0
      %v1174 = vadd.f32 %v395, %v1173
      %v1175 = vpop.f32.mrf.mxu0
      %v1176 = vadd.f32 %v400, %v1175
      %1177 = vdwg.mxu0
      %1178 = vmatpush.bf16.msra.mxu0 %v984
      %1179 = vmatpush.bf16.msra.mxu0 %v976
      %1180 = vmatpush.bf16.msra.mxu0 %v968
      %1181 = vmatpush.bf16.msra.mxu0 %v960
      %1182 = vmatpush.bf16.msra.mxu0 %v952
      %1183 = vmatpush.bf16.msra.mxu0 %v944
      %1184 = vmatpush.bf16.msra.mxu0 %v936
      %1185 = vmatpush.bf16.msra.mxu0 %v928
      %1186 = vmatmul.bf16.gmra.mxu0 %v423
      %v1187 = vpop.f32.mrf.mxu0
      %v1188 = vadd.f32 %v1169, %v1187
      %v1189 = vpop.f32.mrf.mxu0
      %v1190 = vadd.f32 %v1171, %v1189
      %1191 = vmatmul.bf16.gmra.mxu0 %v426
      %v1192 = vpop.f32.mrf.mxu0
      %v1193 = vadd.f32 %v1174, %v1192
      %v1194 = vpop.f32.mrf.mxu0
      %v1195 = vadd.f32 %v1176, %v1194
      %1196 = vdwg.mxu0
      %1197 = vmatpush.bf16.msra.mxu0 0
      %1198 = vmatpush.bf16.msra.mxu0 0
      %1199 = vmatpush.bf16.msra.mxu0 0
      %1200 = vmatpush.bf16.msra.mxu0 0
      %1201 = vmatpush.bf16.msra.mxu0 0
      %1202 = vmatpush.bf16.msra.mxu0 0
      %1203 = vmatpush.bf16.msra.mxu0 %v1000
      %1204 = vmatpush.bf16.msra.mxu0 %v992
      %1205 = vmatmul.bf16.gmra.mxu0 %v1154
      %v1206 = vpop.f32.mrf.mxu0
      %v1207 = vadd.f32 %v1188, %v1206
      %v1208 = vpop.f32.mrf.mxu0
      %v1209 = vadd.f32 %v1190, %v1208
      %1210 = vmatmul.bf16.gmra.mxu0 %v1157
      %v1211 = vpop.f32.mrf.mxu0
      %v1212 = vadd.f32 %v1193, %v1211
      %v1213 = vpop.f32.mrf.mxu0
      %v1214 = vadd.f32 %v1195, %v1213
      %1215 = vdwg.mxu0
      %1216 = vmatpush.bf16.msra.mxu0 %v921
      %1217 = vmatpush.bf16.msra.mxu0 %v913
      %1218 = vmatpush.bf16.msra.mxu0 %v905
      %1219 = vmatpush.bf16.msra.mxu0 %v897
      %1220 = vmatpush.bf16.msra.mxu0 %v889
      %1221 = vmatpush.bf16.msra.mxu0 %v881
      %1222 = vmatpush.bf16.msra.mxu0 %v873
      %1223 = vmatpush.bf16.msra.mxu0 %v865
      %1224 = vmatmul.bf16.gmra.mxu0 %v422
      %v1225 = vpop.f32.mrf.mxu0
      %v1226 = vadd.f32 %v385, %v1225
      %v1227 = vpop.f32.mrf.mxu0
      %v1228 = vadd.f32 %v390, %v1227
      %1229 = vmatmul.bf16.gmra.mxu0 %v425
      %v1230 = vpop.f32.mrf.mxu0
      %v1231 = vadd.f32 %v395, %v1230
      %v1232 = vpop.f32.mrf.mxu0
      %v1233 = vadd.f32 %v400, %v1232
      %1234 = vdwg.mxu0
      %1235 = vmatpush.bf16.msra.mxu0 %v985
      %1236 = vmatpush.bf16.msra.mxu0 %v977
      %1237 = vmatpush.bf16.msra.mxu0 %v969
      %1238 = vmatpush.bf16.msra.mxu0 %v961
      %1239 = vmatpush.bf16.msra.mxu0 %v953
      %1240 = vmatpush.bf16.msra.mxu0 %v945
      %1241 = vmatpush.bf16.msra.mxu0 %v937
      %1242 = vmatpush.bf16.msra.mxu0 %v929
      %1243 = vmatmul.bf16.gmra.mxu0 %v423
      %v1244 = vpop.f32.mrf.mxu0
      %v1245 = vadd.f32 %v1226, %v1244
      %v1246 = vpop.f32.mrf.mxu0
      %v1247 = vadd.f32 %v1228, %v1246
      %1248 = vmatmul.bf16.gmra.mxu0 %v426
      %v1249 = vpop.f32.mrf.mxu0
      %v1250 = vadd.f32 %v1231, %v1249
      %v1251 = vpop.f32.mrf.mxu0
      %v1252 = vadd.f32 %v1233, %v1251
      %1253 = vdwg.mxu0
      %1254 = vmatpush.bf16.msra.mxu0 0
      %1255 = vmatpush.bf16.msra.mxu0 0
      %1256 = vmatpush.bf16.msra.mxu0 0
      %1257 = vmatpush.bf16.msra.mxu0 0
      %1258 = vmatpush.bf16.msra.mxu0 0
      %1259 = vmatpush.bf16.msra.mxu0 0
      %1260 = vmatpush.bf16.msra.mxu0 %v1001
      %1261 = vmatpush.bf16.msra.mxu0 %v993
      %1262 = vmatmul.bf16.gmra.mxu0 %v1154
      %v1263 = vpop.f32.mrf.mxu0
      %v1264 = vadd.f32 %v1245, %v1263
      %v1265 = vpop.f32.mrf.mxu0
      %v1266 = vadd.f32 %v1247, %v1265
      %1267 = vmatmul.bf16.gmra.mxu0 %v1157
      %v1268 = vpop.f32.mrf.mxu0
      %v1269 = vadd.f32 %v1250, %v1268
      %v1270 = vpop.f32.mrf.mxu0
      %v1271 = vadd.f32 %v1252, %v1270
      %1272 = vdwg.mxu0
      %1273 = vmatpush.bf16.msra.mxu0 %v922
      %1274 = vmatpush.bf16.msra.mxu0 %v914
      %1275 = vmatpush.bf16.msra.mxu0 %v906
      %1276 = vmatpush.bf16.msra.mxu0 %v898
      %1277 = vmatpush.bf16.msra.mxu0 %v890
      %1278 = vmatpush.bf16.msra.mxu0 %v882
      %1279 = vmatpush.bf16.msra.mxu0 %v874
      %1280 = vmatpush.bf16.msra.mxu0 %v866
      %1281 = vmatmul.bf16.gmra.mxu0 %v422
      %v1282 = vpop.f32.mrf.mxu0
      %v1283 = vadd.f32 %v385, %v1282
      %v1284 = vpop.f32.mrf.mxu0
      %v1285 = vadd.f32 %v390, %v1284
      %1286 = vmatmul.bf16.gmra.mxu0 %v425
      %v1287 = vpop.f32.mrf.mxu0
      %v1288 = vadd.f32 %v395, %v1287
      %v1289 = vpop.f32.mrf.mxu0
      %v1290 = vadd.f32 %v400, %v1289
      %1291 = vdwg.mxu0
      %1292 = vmatpush.bf16.msra.mxu0 %v986
      %1293 = vmatpush.bf16.msra.mxu0 %v978
      %1294 = vmatpush.bf16.msra.mxu0 %v970
      %1295 = vmatpush.bf16.msra.mxu0 %v962
      %1296 = vmatpush.bf16.msra.mxu0 %v954
      %1297 = vmatpush.bf16.msra.mxu0 %v946
      %1298 = vmatpush.bf16.msra.mxu0 %v938
      %1299 = vmatpush.bf16.msra.mxu0 %v930
      %1300 = vmatmul.bf16.gmra.mxu0 %v423
      %v1301 = vpop.f32.mrf.mxu0
      %v1302 = vadd.f32 %v1283, %v1301
      %v1303 = vpop.f32.mrf.mxu0
      %v1304 = vadd.f32 %v1285, %v1303
      %1305 = vmatmul.bf16.gmra.mxu0 %v426
      %v1306 = vpop.f32.mrf.mxu0
      %v1307 = vadd.f32 %v1288, %v1306
      %v1308 = vpop.f32.mrf.mxu0
      %v1309 = vadd.f32 %v1290, %v1308
      %1310 = vdwg.mxu0
      %1311 = vmatpush.bf16.msra.mxu0 0
      %1312 = vmatpush.bf16.msra.mxu0 0
      %1313 = vmatpush.bf16.msra.mxu0 0
      %1314 = vmatpush.bf16.msra.mxu0 0
      %1315 = vmatpush.bf16.msra.mxu0 0
      %1316 = vmatpush.bf16.msra.mxu0 0
      %1317 = vmatpush.bf16.msra.mxu0 %v1002
      %1318 = vmatpush.bf16.msra.mxu0 %v994
      %1319 = vmatmul.bf16.gmra.mxu0 %v1154
      %v1320 = vpop.f32.mrf.mxu0
      %v1321 = vadd.f32 %v1302, %v1320
      %v1322 = vpop.f32.mrf.mxu0
      %v1323 = vadd.f32 %v1304, %v1322
      %1324 = vmatmul.bf16.gmra.mxu0 %v1157
      %v1325 = vpop.f32.mrf.mxu0
      %v1326 = vadd.f32 %v1307, %v1325
      %v1327 = vpop.f32.mrf.mxu0
      %v1328 = vadd.f32 %v1309, %v1327
      %1329 = vdwg.mxu0
      %1330 = vmatpush.bf16.msra.mxu0 %v923
      %1331 = vmatpush.bf16.msra.mxu0 %v915
      %1332 = vmatpush.bf16.msra.mxu0 %v907
      %1333 = vmatpush.bf16.msra.mxu0 %v899
      %1334 = vmatpush.bf16.msra.mxu0 %v891
      %1335 = vmatpush.bf16.msra.mxu0 %v883
      %1336 = vmatpush.bf16.msra.mxu0 %v875
      %1337 = vmatpush.bf16.msra.mxu0 %v867
      %1338 = vmatmul.bf16.gmra.mxu0 %v422
      %v1339 = vpop.f32.mrf.mxu0
      %v1340 = vadd.f32 %v385, %v1339
      %v1341 = vpop.f32.mrf.mxu0
      %v1342 = vadd.f32 %v390, %v1341
      %1343 = vmatmul.bf16.gmra.mxu0 %v425
      %v1344 = vpop.f32.mrf.mxu0
      %v1345 = vadd.f32 %v395, %v1344
      %v1346 = vpop.f32.mrf.mxu0
      %v1347 = vadd.f32 %v400, %v1346
      %1348 = vdwg.mxu0
      %1349 = vmatpush.bf16.msra.mxu0 %v987
      %1350 = vmatpush.bf16.msra.mxu0 %v979
      %1351 = vmatpush.bf16.msra.mxu0 %v971
      %1352 = vmatpush.bf16.msra.mxu0 %v963
      %1353 = vmatpush.bf16.msra.mxu0 %v955
      %1354 = vmatpush.bf16.msra.mxu0 %v947
      %1355 = vmatpush.bf16.msra.mxu0 %v939
      %1356 = vmatpush.bf16.msra.mxu0 %v931
      %1357 = vmatmul.bf16.gmra.mxu0 %v423
      %v1358 = vpop.f32.mrf.mxu0
      %v1359 = vadd.f32 %v1340, %v1358
      %v1360 = vpop.f32.mrf.mxu0
      %v1361 = vadd.f32 %v1342, %v1360
      %1362 = vmatmul.bf16.gmra.mxu0 %v426
      %v1363 = vpop.f32.mrf.mxu0
      %v1364 = vadd.f32 %v1345, %v1363
      %v1365 = vpop.f32.mrf.mxu0
      %v1366 = vadd.f32 %v1347, %v1365
      %1367 = vdwg.mxu0
      %1368 = vmatpush.bf16.msra.mxu0 0
      %1369 = vmatpush.bf16.msra.mxu0 0
      %1370 = vmatpush.bf16.msra.mxu0 0
      %1371 = vmatpush.bf16.msra.mxu0 0
      %1372 = vmatpush.bf16.msra.mxu0 0
      %1373 = vmatpush.bf16.msra.mxu0 0
      %1374 = vmatpush.bf16.msra.mxu0 %v1003
      %1375 = vmatpush.bf16.msra.mxu0 %v995
      %1376 = vmatmul.bf16.gmra.mxu0 %v1154
      %v1377 = vpop.f32.mrf.mxu0
      %v1378 = vadd.f32 %v1359, %v1377
      %v1379 = vpop.f32.mrf.mxu0
      %v1380 = vadd.f32 %v1361, %v1379
      %1381 = vmatmul.bf16.gmra.mxu0 %v1157
      %v1382 = vpop.f32.mrf.mxu0
      %v1383 = vadd.f32 %v1364, %v1382
      %v1384 = vpop.f32.mrf.mxu0
      %v1385 = vadd.f32 %v1366, %v1384
      %1386 = vdwg.mxu0
      %1387 = vmatpush.bf16.msra.mxu0 %v924
      %1388 = vmatpush.bf16.msra.mxu0 %v916
      %1389 = vmatpush.bf16.msra.mxu0 %v908
      %1390 = vmatpush.bf16.msra.mxu0 %v900
      %1391 = vmatpush.bf16.msra.mxu0 %v892
      %1392 = vmatpush.bf16.msra.mxu0 %v884
      %1393 = vmatpush.bf16.msra.mxu0 %v876
      %1394 = vmatpush.bf16.msra.mxu0 %v868
      %1395 = vmatmul.bf16.gmra.mxu0 %v422
      %v1396 = vpop.f32.mrf.mxu0
      %v1397 = vadd.f32 %v385, %v1396
      %v1398 = vpop.f32.mrf.mxu0
      %v1399 = vadd.f32 %v390, %v1398
      %1400 = vmatmul.bf16.gmra.mxu0 %v425
      %v1401 = vpop.f32.mrf.mxu0
      %v1402 = vadd.f32 %v395, %v1401
      %v1403 = vpop.f32.mrf.mxu0
      %v1404 = vadd.f32 %v400, %v1403
      %1405 = vdwg.mxu0
      %1406 = vmatpush.bf16.msra.mxu0 %v988
      %1407 = vmatpush.bf16.msra.mxu0 %v980
      %1408 = vmatpush.bf16.msra.mxu0 %v972
      %1409 = vmatpush.bf16.msra.mxu0 %v964
      %1410 = vmatpush.bf16.msra.mxu0 %v956
      %1411 = vmatpush.bf16.msra.mxu0 %v948
      %1412 = vmatpush.bf16.msra.mxu0 %v940
      %1413 = vmatpush.bf16.msra.mxu0 %v932
      %1414 = vmatmul.bf16.gmra.mxu0 %v423
      %v1415 = vpop.f32.mrf.mxu0
      %v1416 = vadd.f32 %v1397, %v1415
      %v1417 = vpop.f32.mrf.mxu0
      %v1418 = vadd.f32 %v1399, %v1417
      %1419 = vmatmul.bf16.gmra.mxu0 %v426
      %v1420 = vpop.f32.mrf.mxu0
      %v1421 = vadd.f32 %v1402, %v1420
      %v1422 = vpop.f32.mrf.mxu0
      %v1423 = vadd.f32 %v1404, %v1422
      %1424 = vdwg.mxu0
      %1425 = vmatpush.bf16.msra.mxu0 0
      %1426 = vmatpush.bf16.msra.mxu0 0
      %1427 = vmatpush.bf16.msra.mxu0 0
      %1428 = vmatpush.bf16.msra.mxu0 0
      %1429 = vmatpush.bf16.msra.mxu0 0
      %1430 = vmatpush.bf16.msra.mxu0 0
      %1431 = vmatpush.bf16.msra.mxu0 %v1004
      %1432 = vmatpush.bf16.msra.mxu0 %v996
      %1433 = vmatmul.bf16.gmra.mxu0 %v1154
      %v1434 = vpop.f32.mrf.mxu0
      %v1435 = vadd.f32 %v1416, %v1434
      %v1436 = vpop.f32.mrf.mxu0
      %v1437 = vadd.f32 %v1418, %v1436
      %1438 = vmatmul.bf16.gmra.mxu0 %v1157
      %v1439 = vpop.f32.mrf.mxu0
      %v1440 = vadd.f32 %v1421, %v1439
      %v1441 = vpop.f32.mrf.mxu0
      %v1442 = vadd.f32 %v1423, %v1441
      %1443 = vdwg.mxu0
      %1444 = vmatpush.bf16.msra.mxu0 %v925
      %1445 = vmatpush.bf16.msra.mxu0 %v917
      %1446 = vmatpush.bf16.msra.mxu0 %v909
      %1447 = vmatpush.bf16.msra.mxu0 %v901
      %1448 = vmatpush.bf16.msra.mxu0 %v893
      %1449 = vmatpush.bf16.msra.mxu0 %v885
      %1450 = vmatpush.bf16.msra.mxu0 %v877
      %1451 = vmatpush.bf16.msra.mxu0 %v869
      %1452 = vmatmul.bf16.gmra.mxu0 %v422
      %v1453 = vpop.f32.mrf.mxu0
      %v1454 = vadd.f32 %v385, %v1453
      %v1455 = vpop.f32.mrf.mxu0
      %v1456 = vadd.f32 %v390, %v1455
      %1457 = vmatmul.bf16.gmra.mxu0 %v425
      %v1458 = vpop.f32.mrf.mxu0
      %v1459 = vadd.f32 %v395, %v1458
      %v1460 = vpop.f32.mrf.mxu0
      %v1461 = vadd.f32 %v400, %v1460
      %1462 = vdwg.mxu0
      %1463 = vmatpush.bf16.msra.mxu0 %v989
      %1464 = vmatpush.bf16.msra.mxu0 %v981
      %1465 = vmatpush.bf16.msra.mxu0 %v973
      %1466 = vmatpush.bf16.msra.mxu0 %v965
      %1467 = vmatpush.bf16.msra.mxu0 %v957
      %1468 = vmatpush.bf16.msra.mxu0 %v949
      %1469 = vmatpush.bf16.msra.mxu0 %v941
      %1470 = vmatpush.bf16.msra.mxu0 %v933
      %1471 = vmatmul.bf16.gmra.mxu0 %v423
      %v1472 = vpop.f32.mrf.mxu0
      %v1473 = vadd.f32 %v1454, %v1472
      %v1474 = vpop.f32.mrf.mxu0
      %v1475 = vadd.f32 %v1456, %v1474
      %1476 = vmatmul.bf16.gmra.mxu0 %v426
      %v1477 = vpop.f32.mrf.mxu0
      %v1478 = vadd.f32 %v1459, %v1477
      %v1479 = vpop.f32.mrf.mxu0
      %v1480 = vadd.f32 %v1461, %v1479
      %1481 = vdwg.mxu0
      %1482 = vmatpush.bf16.msra.mxu0 0
      %1483 = vmatpush.bf16.msra.mxu0 0
      %1484 = vmatpush.bf16.msra.mxu0 0
      %1485 = vmatpush.bf16.msra.mxu0 0
      %1486 = vmatpush.bf16.msra.mxu0 0
      %1487 = vmatpush.bf16.msra.mxu0 0
      %1488 = vmatpush.bf16.msra.mxu0 %v1005
      %1489 = vmatpush.bf16.msra.mxu0 %v997
      %1490 = vmatmul.bf16.gmra.mxu0 %v1154
      %v1491 = vpop.f32.mrf.mxu0
      %v1492 = vadd.f32 %v1473, %v1491
      %v1493 = vpop.f32.mrf.mxu0
      %v1494 = vadd.f32 %v1475, %v1493
      %1495 = vmatmul.bf16.gmra.mxu0 %v1157
      %v1496 = vpop.f32.mrf.mxu0
      %v1497 = vadd.f32 %v1478, %v1496
      %v1498 = vpop.f32.mrf.mxu0
      %v1499 = vadd.f32 %v1480, %v1498
      %1500 = vdwg.mxu0
      %1501 = vmatpush.bf16.msra.mxu0 %v926
      %1502 = vmatpush.bf16.msra.mxu0 %v918
      %1503 = vmatpush.bf16.msra.mxu0 %v910
      %1504 = vmatpush.bf16.msra.mxu0 %v902
      %1505 = vmatpush.bf16.msra.mxu0 %v894
      %1506 = vmatpush.bf16.msra.mxu0 %v886
      %1507 = vmatpush.bf16.msra.mxu0 %v878
      %1508 = vmatpush.bf16.msra.mxu0 %v870
      %1509 = vmatmul.bf16.gmra.mxu0 %v422
      %v1510 = vpop.f32.mrf.mxu0
      %v1511 = vadd.f32 %v385, %v1510
      %v1512 = vpop.f32.mrf.mxu0
      %v1513 = vadd.f32 %v390, %v1512
      %1514 = vmatmul.bf16.gmra.mxu0 %v425
      %v1515 = vpop.f32.mrf.mxu0
      %v1516 = vadd.f32 %v395, %v1515
      %v1517 = vpop.f32.mrf.mxu0
      %v1518 = vadd.f32 %v400, %v1517
      %1519 = vdwg.mxu0
      %1520 = vmatpush.bf16.msra.mxu0 %v990
      %1521 = vmatpush.bf16.msra.mxu0 %v982
      %1522 = vmatpush.bf16.msra.mxu0 %v974
      %1523 = vmatpush.bf16.msra.mxu0 %v966
      %1524 = vmatpush.bf16.msra.mxu0 %v958
      %1525 = vmatpush.bf16.msra.mxu0 %v950
      %1526 = vmatpush.bf16.msra.mxu0 %v942
      %1527 = vmatpush.bf16.msra.mxu0 %v934
      %1528 = vmatmul.bf16.gmra.mxu0 %v423
      %v1529 = vpop.f32.mrf.mxu0
      %v1530 = vadd.f32 %v1511, %v1529
      %v1531 = vpop.f32.mrf.mxu0
      %v1532 = vadd.f32 %v1513, %v1531
      %1533 = vmatmul.bf16.gmra.mxu0 %v426
      %v1534 = vpop.f32.mrf.mxu0
      %v1535 = vadd.f32 %v1516, %v1534
      %v1536 = vpop.f32.mrf.mxu0
      %v1537 = vadd.f32 %v1518, %v1536
      %1538 = vdwg.mxu0
      %1539 = vmatpush.bf16.msra.mxu0 0
      %1540 = vmatpush.bf16.msra.mxu0 0
      %1541 = vmatpush.bf16.msra.mxu0 0
      %1542 = vmatpush.bf16.msra.mxu0 0
      %1543 = vmatpush.bf16.msra.mxu0 0
      %1544 = vmatpush.bf16.msra.mxu0 0
      %1545 = vmatpush.bf16.msra.mxu0 %v1006
      %1546 = vmatpush.bf16.msra.mxu0 %v998
      %1547 = vmatmul.bf16.gmra.mxu0 %v1154
      %v1548 = vpop.f32.mrf.mxu0
      %v1549 = vadd.f32 %v1530, %v1548
      %v1550 = vpop.f32.mrf.mxu0
      %v1551 = vadd.f32 %v1532, %v1550
      %1552 = vmatmul.bf16.gmra.mxu0 %v1157
      %v1553 = vpop.f32.mrf.mxu0
      %v1554 = vadd.f32 %v1535, %v1553
      %v1555 = vpop.f32.mrf.mxu0
      %v1556 = vadd.f32 %v1537, %v1555
      %1557 = vdwg.mxu0
      %1558 = vmatpush.bf16.msra.mxu0 %v927
      %1559 = vmatpush.bf16.msra.mxu0 %v919
      %1560 = vmatpush.bf16.msra.mxu0 %v911
      %1561 = vmatpush.bf16.msra.mxu0 %v903
      %1562 = vmatpush.bf16.msra.mxu0 %v895
      %1563 = vmatpush.bf16.msra.mxu0 %v887
      %1564 = vmatpush.bf16.msra.mxu0 %v879
      %1565 = vmatpush.bf16.msra.mxu0 %v871
      %1566 = vmatmul.bf16.gmra.mxu0 %v422
      %v1567 = vpop.f32.mrf.mxu0
      %v1568 = vadd.f32 %v385, %v1567
      %v1569 = vpop.f32.mrf.mxu0
      %v1570 = vadd.f32 %v390, %v1569
      %1571 = vmatmul.bf16.gmra.mxu0 %v425
      %v1572 = vpop.f32.mrf.mxu0
      %v1573 = vadd.f32 %v395, %v1572
      %v1574 = vpop.f32.mrf.mxu0
      %v1575 = vadd.f32 %v400, %v1574
      %1576 = vdwg.mxu0
      %1577 = vmatpush.bf16.msra.mxu0 %v991
      %1578 = vmatpush.bf16.msra.mxu0 %v983
      %1579 = vmatpush.bf16.msra.mxu0 %v975
      %1580 = vmatpush.bf16.msra.mxu0 %v967
      %1581 = vmatpush.bf16.msra.mxu0 %v959
      %1582 = vmatpush.bf16.msra.mxu0 %v951
      %1583 = vmatpush.bf16.msra.mxu0 %v943
      %1584 = vmatpush.bf16.msra.mxu0 %v935
      %1585 = vmatmul.bf16.gmra.mxu0 %v423
      %v1586 = vpop.f32.mrf.mxu0
      %v1587 = vadd.f32 %v1568, %v1586
      %v1588 = vpop.f32.mrf.mxu0
      %v1589 = vadd.f32 %v1570, %v1588
      %1590 = vmatmul.bf16.gmra.mxu0 %v426
      %v1591 = vpop.f32.mrf.mxu0
      %v1592 = vadd.f32 %v1573, %v1591
      %v1593 = vpop.f32.mrf.mxu0
      %v1594 = vadd.f32 %v1575, %v1593
      %1595 = vdwg.mxu0
      %1596 = vmatpush.bf16.msra.mxu0 0
      %1597 = vmatpush.bf16.msra.mxu0 0
      %1598 = vmatpush.bf16.msra.mxu0 0
      %1599 = vmatpush.bf16.msra.mxu0 0
      %1600 = vmatpush.bf16.msra.mxu0 0
      %1601 = vmatpush.bf16.msra.mxu0 0
      %1602 = vmatpush.bf16.msra.mxu0 %v1007
      %1603 = vmatpush.bf16.msra.mxu0 %v999
      %1604 = vmatmul.bf16.gmra.mxu0 %v1154
      %v1605 = vpop.f32.mrf.mxu0
      %v1606 = vadd.f32 %v1587, %v1605
      %v1607 = vpop.f32.mrf.mxu0
      %v1608 = vadd.f32 %v1589, %v1607
      %1609 = vmatmul.bf16.gmra.mxu0 %v1157
      %v1610 = vpop.f32.mrf.mxu0
      %v1611 = vadd.f32 %v1592, %v1610
      %v1612 = vpop.f32.mrf.mxu0
      %v1613 = vadd.f32 %v1594, %v1612
      %1614 = vdwg.mxu0
      %v1615 = vpack.c.bf16 %v1264, %v1207
      %v1616 = vpack.c.bf16 %v1378, %v1321
      %v1617 = vpack.c.bf16 %v1492, %v1435
      %v1618 = vpack.c.bf16 %v1606, %v1549
      %v1619 = vpack.c.bf16 %v1266, %v1209
      %v1620 = vpack.c.bf16 %v1380, %v1323
      %v1621 = vpack.c.bf16 %v1494, %v1437
      %v1622 = vpack.c.bf16 %v1608, %v1551
      %v1623 = vpack.c.bf16 %v1269, %v1212
      %v1624 = vpack.c.bf16 %v1383, %v1326
      %v1625 = vpack.c.bf16 %v1497, %v1440
      %v1626 = vpack.c.bf16 %v1611, %v1554
      %v1627 = vpack.c.bf16 %v1271, %v1214
      %v1628 = vpack.c.bf16 %v1385, %v1328
      %v1629 = vpack.c.bf16 %v1499, %v1442
      %v1630 = vpack.c.bf16 %v1613, %v1556
      %1631 = vst [vmem:[#allocation2 + $0x80] sm:$0xff] %v1615
      %1632 = vst [vmem:[#allocation2 + $0x88] sm:$0xff] %v1616
      %1633 = vst [vmem:[#allocation2 + $0x90] sm:$0xff] %v1617
      %1634 = vst [vmem:[#allocation2 + $0x98] sm:$0xff] %v1618
      %1635 = vst [vmem:[#allocation2 + $0xa0] sm:$0xff] %v1619
      %1636 = vst [vmem:[#allocation2 + $0xa8] sm:$0xff] %v1620
      %1637 = vst [vmem:[#allocation2 + $0xb0] sm:$0xff] %v1621
      %1638 = vst [vmem:[#allocation2 + $0xb8] sm:$0xff] %v1622
      %1639 = vst [vmem:[#allocation2 + $0xc0] sm:$0xff] %v1623
      %1640 = vst [vmem:[#allocation2 + $0xc8] sm:$0xff] %v1624
      %1641 = vst [vmem:[#allocation2 + $0xd0] sm:$0xff] %v1625
      %1642 = vst [vmem:[#allocation2 + $0xd8] sm:$0xff] %v1626
      %1643 = vst [vmem:[#allocation2 + $0xe0] sm:$0xff] %v1627
      %1644 = vst [vmem:[#allocation2 + $0xe8] sm:$0xff] %v1628
      %1645 = vst [vmem:[#allocation2 + $0xf0] sm:$0xff] %v1629
      %1646 = vst [vmem:[#allocation2 + $0xf8] sm:$0xff] %v1630
      %1647 = vst [vmem:[#allocation2] sm:$0xff] 0
      %1648 = vst [vmem:[#allocation2 + $0x20] sm:$0xff] 0
      %1649 = vst [vmem:[#allocation2 + $0x40] sm:$0xff] 0
      %1650 = vst [vmem:[#allocation2 + $0x60] sm:$0xff] 0
      %1651 = vst [vmem:[#allocation2 + $0x8] sm:$0xff] %v1615
      %1652 = vst [vmem:[#allocation2 + $0x10] sm:$0xff] %v1616
      %1653 = vst [vmem:[#allocation2 + $0x18] sm:$0xff] %v1617
      %1654 = vst [vmem:[#allocation2 + $0x28] sm:$0xff] %v1619
      %1655 = vst [vmem:[#allocation2 + $0x30] sm:$0xff] %v1620
      %1656 = vst [vmem:[#allocation2 + $0x38] sm:$0xff] %v1621
      %1657 = vst [vmem:[#allocation2 + $0x48] sm:$0xff] %v1623
      %1658 = vst [vmem:[#allocation2 + $0x50] sm:$0xff] %v1624
      %1659 = vst [vmem:[#allocation2 + $0x58] sm:$0xff] %v1625
      %1660 = vst [vmem:[#allocation2 + $0x68] sm:$0xff] %v1627
      %1661 = vst [vmem:[#allocation2 + $0x70] sm:$0xff] %v1628
      %1662 = vst [vmem:[#allocation2 + $0x78] sm:$0xff] %v1629
      %1663 = vst [vmem:[#allocation2 + $0x100] sm:$0xff] %v1616
      %1664 = vst [vmem:[#allocation2 + $0x108] sm:$0xff] %v1617
      %1665 = vst [vmem:[#allocation2 + $0x110] sm:$0xff] %v1618
      %1666 = vst [vmem:[#allocation2 + $0x120] sm:$0xff] %v1620
      %1667 = vst [vmem:[#allocation2 + $0x128] sm:$0xff] %v1621
      %1668 = vst [vmem:[#allocation2 + $0x130] sm:$0xff] %v1622
      %1669 = vst [vmem:[#allocation2 + $0x140] sm:$0xff] %v1624
      %1670 = vst [vmem:[#allocation2 + $0x148] sm:$0xff] %v1625
      %1671 = vst [vmem:[#allocation2 + $0x150] sm:$0xff] %v1626
      %1672 = vst [vmem:[#allocation2 + $0x160] sm:$0xff] %v1628
      %1673 = vst [vmem:[#allocation2 + $0x168] sm:$0xff] %v1629
      %1674 = vst [vmem:[#allocation2 + $0x170] sm:$0xff] %v1630
      %1675 = vst [vmem:[#allocation2 + $0x118] sm:$0xff] 0
      %1676 = vst [vmem:[#allocation2 + $0x138] sm:$0xff] 0
      %1677 = vst [vmem:[#allocation2 + $0x158] sm:$0xff] 0
      %1678 = vst [vmem:[#allocation2 + $0x178] sm:$0xff] 0
      %v1679 = vld [vmem:[%s3] sm:$0xf]
      %v1680 = vld [vmem:[%s3 + $0x4] sm:$0xf]
      %v1681 = vld [vmem:[%s3 + $0x8] sm:$0xf]
      %v1682 = vld [vmem:[%s3 + $0xc] sm:$0xf]
      %v1683 = vld [vmem:[#allocation2] sm:$0xff]
      %v1684 = vld [vmem:[#allocation2 + $0x8] sm:$0xff]
      %v1685 = vld [vmem:[#allocation2 + $0x10] sm:$0xff]
      %v1686 = vld [vmem:[#allocation2 + $0x18] sm:$0xff]
      %v1687 = vld [vmem:[#allocation2 + $0x20] sm:$0xff]
      %v1688 = vld [vmem:[#allocation2 + $0x28] sm:$0xff]
      %v1689 = vld [vmem:[#allocation2 + $0x30] sm:$0xff]
      %v1690 = vld [vmem:[#allocation2 + $0x38] sm:$0xff]
      %v1691 = vld [vmem:[#allocation2 + $0x40] sm:$0xff]
      %v1692 = vld [vmem:[#allocation2 + $0x48] sm:$0xff]
      %v1693 = vld [vmem:[#allocation2 + $0x50] sm:$0xff]
      %v1694 = vld [vmem:[#allocation2 + $0x58] sm:$0xff]
      %v1695 = vld [vmem:[#allocation2 + $0x60] sm:$0xff]
      %v1696 = vld [vmem:[#allocation2 + $0x68] sm:$0xff]
      %v1697 = vld [vmem:[#allocation2 + $0x70] sm:$0xff]
      %v1698 = vld [vmem:[#allocation2 + $0x78] sm:$0xff]
      %v1699 = vld [vmem:[#allocation2 + $0x80] sm:$0xff]
      %v1700 = vld [vmem:[#allocation2 + $0x88] sm:$0xff]
      %v1701 = vld [vmem:[#allocation2 + $0x90] sm:$0xff]
      %v1702 = vld [vmem:[#allocation2 + $0x98] sm:$0xff]
      %v1703 = vld [vmem:[#allocation2 + $0xa0] sm:$0xff]
      %v1704 = vld [vmem:[#allocation2 + $0xa8] sm:$0xff]
      %v1705 = vld [vmem:[#allocation2 + $0xb0] sm:$0xff]
      %v1706 = vld [vmem:[#allocation2 + $0xb8] sm:$0xff]
      %v1707 = vld [vmem:[#allocation2 + $0xc0] sm:$0xff]
      %v1708 = vld [vmem:[#allocation2 + $0xc8] sm:$0xff]
      %v1709 = vld [vmem:[#allocation2 + $0xd0] sm:$0xff]
      %v1710 = vld [vmem:[#allocation2 + $0xd8] sm:$0xff]
      %v1711 = vld [vmem:[#allocation2 + $0xe0] sm:$0xff]
      %v1712 = vld [vmem:[#allocation2 + $0xe8] sm:$0xff]
      %v1713 = vld [vmem:[#allocation2 + $0xf0] sm:$0xff]
      %v1714 = vld [vmem:[#allocation2 + $0xf8] sm:$0xff]
      %v1715 = vld [vmem:[#allocation2 + $0x100] sm:$0xff]
      %v1716 = vld [vmem:[#allocation2 + $0x108] sm:$0xff]
      %v1717 = vld [vmem:[#allocation2 + $0x110] sm:$0xff]
      %v1718 = vld [vmem:[#allocation2 + $0x118] sm:$0xff]
      %v1719 = vld [vmem:[#allocation2 + $0x120] sm:$0xff]
      %v1720 = vld [vmem:[#allocation2 + $0x128] sm:$0xff]
      %v1721 = vld [vmem:[#allocation2 + $0x130] sm:$0xff]
      %v1722 = vld [vmem:[#allocation2 + $0x138] sm:$0xff]
      %v1723 = vld [vmem:[#allocation2 + $0x140] sm:$0xff]
      %v1724 = vld [vmem:[#allocation2 + $0x148] sm:$0xff]
      %v1725 = vld [vmem:[#allocation2 + $0x150] sm:$0xff]
      %v1726 = vld [vmem:[#allocation2 + $0x158] sm:$0xff]
      %v1727 = vld [vmem:[#allocation2 + $0x160] sm:$0xff]
      %v1728 = vld [vmem:[#allocation2 + $0x168] sm:$0xff]
      %v1729 = vld [vmem:[#allocation2 + $0x170] sm:$0xff]
      %v1730 = vld [vmem:[#allocation2 + $0x178] sm:$0xff]
      %v1731 = vld [vmem:[%s4] sm:$0xff]
      %v1732 = vld [vmem:[%s4 + $0x8] sm:$0xff]
      %v1733 = vld [vmem:[%s4 + $0x10] sm:$0xff]
      %v1734 = vld [vmem:[%s4 + $0x18] sm:$0xff]
      %1736 = vset.pattern.permute.xlu0 0
      %1737 = vperm.xlu0 %1736, %v1731
      %v1738 = vpop.permute.xlu0 %1737
      %1741 = vset.pattern.permute.xlu0 0
      %1742 = vperm.xlu0 %1741, %v1732
      %v1743 = vpop.permute.xlu0 %1742
      %1746 = vset.pattern.permute.xlu0 0
      %1747 = vperm.xlu0 %1746, %v1733
      %v1748 = vpop.permute.xlu0 %1747
      %1751 = vset.pattern.permute.xlu0 0
      %1752 = vperm.xlu0 %1751, %v1734
      %v1753 = vpop.permute.xlu0 %1752
      %v1759 = vunpack.c.l.b16 %v1679
      %v1760 = vunpack.c.l.b16 %v1680
      %v1761 = vunpack.c.l.b16 %v1681
      %v1762 = vunpack.c.l.b16 %v1682
      %v1763 = vpack.c.b16 %v1760, %v1759
      %v1764 = vpack.c.b16 %v1762, %v1761
      %v1813 = vunpack.c.l.b16 %v1683
      %v1814 = vunpack.c.h.b16 %v1683
      %v1815 = vunpack.c.l.b16 %v1684
      %v1816 = vunpack.c.h.b16 %v1684
      %v1817 = vunpack.c.l.b16 %v1685
      %v1818 = vunpack.c.h.b16 %v1685
      %v1819 = vunpack.c.l.b16 %v1686
      %v1820 = vunpack.c.h.b16 %v1686
      %v1821 = vunpack.c.l.b16 %v1687
      %v1822 = vunpack.c.h.b16 %v1687
      %v1823 = vunpack.c.l.b16 %v1688
      %v1824 = vunpack.c.h.b16 %v1688
      %v1825 = vunpack.c.l.b16 %v1689
      %v1826 = vunpack.c.h.b16 %v1689
      %v1827 = vunpack.c.l.b16 %v1690
      %v1828 = vunpack.c.h.b16 %v1690
      %v1829 = vunpack.c.l.b16 %v1691
      %v1830 = vunpack.c.h.b16 %v1691
      %v1831 = vunpack.c.l.b16 %v1692
      %v1832 = vunpack.c.h.b16 %v1692
      %v1833 = vunpack.c.l.b16 %v1693
      %v1834 = vunpack.c.h.b16 %v1693
      %v1835 = vunpack.c.l.b16 %v1694
      %v1836 = vunpack.c.h.b16 %v1694
      %v1837 = vunpack.c.l.b16 %v1695
      %v1838 = vunpack.c.h.b16 %v1695
      %v1839 = vunpack.c.l.b16 %v1696
      %v1840 = vunpack.c.h.b16 %v1696
      %v1841 = vunpack.c.l.b16 %v1697
      %v1842 = vunpack.c.h.b16 %v1697
      %v1843 = vunpack.c.l.b16 %v1698
      %v1844 = vunpack.c.h.b16 %v1698
      %v1845 = vunpack.c.l.b16 %v1699
      %v1846 = vunpack.c.h.b16 %v1699
      %v1847 = vunpack.c.l.b16 %v1700
      %v1848 = vunpack.c.h.b16 %v1700
      %v1849 = vunpack.c.l.b16 %v1701
      %v1850 = vunpack.c.h.b16 %v1701
      %v1851 = vunpack.c.l.b16 %v1702
      %v1852 = vunpack.c.h.b16 %v1702
      %v1853 = vunpack.c.l.b16 %v1703
      %v1854 = vunpack.c.h.b16 %v1703
      %v1855 = vunpack.c.l.b16 %v1704
      %v1856 = vunpack.c.h.b16 %v1704
      %v1857 = vunpack.c.l.b16 %v1705
      %v1858 = vunpack.c.h.b16 %v1705
      %v1859 = vunpack.c.l.b16 %v1706
      %v1860 = vunpack.c.h.b16 %v1706
      %v1861 = vunpack.c.l.b16 %v1707
      %v1862 = vunpack.c.h.b16 %v1707
      %v1863 = vunpack.c.l.b16 %v1708
      %v1864 = vunpack.c.h.b16 %v1708
      %v1865 = vunpack.c.l.b16 %v1709
      %v1866 = vunpack.c.h.b16 %v1709
      %v1867 = vunpack.c.l.b16 %v1710
      %v1868 = vunpack.c.h.b16 %v1710
      %v1869 = vunpack.c.l.b16 %v1711
      %v1870 = vunpack.c.h.b16 %v1711
      %v1871 = vunpack.c.l.b16 %v1712
      %v1872 = vunpack.c.h.b16 %v1712
      %v1873 = vunpack.c.l.b16 %v1713
      %v1874 = vunpack.c.h.b16 %v1713
      %v1875 = vunpack.c.l.b16 %v1714
      %v1876 = vunpack.c.h.b16 %v1714
      %v1877 = vunpack.c.l.b16 %v1715
      %v1878 = vunpack.c.h.b16 %v1715
      %v1879 = vunpack.c.l.b16 %v1716
      %v1880 = vunpack.c.h.b16 %v1716
      %v1881 = vunpack.c.l.b16 %v1717
      %v1882 = vunpack.c.h.b16 %v1717
      %v1883 = vunpack.c.l.b16 %v1718
      %v1884 = vunpack.c.h.b16 %v1718
      %v1885 = vunpack.c.l.b16 %v1719
      %v1886 = vunpack.c.h.b16 %v1719
      %v1887 = vunpack.c.l.b16 %v1720
      %v1888 = vunpack.c.h.b16 %v1720
      %v1889 = vunpack.c.l.b16 %v1721
      %v1890 = vunpack.c.h.b16 %v1721
      %v1891 = vunpack.c.l.b16 %v1722
      %v1892 = vunpack.c.h.b16 %v1722
      %v1893 = vunpack.c.l.b16 %v1723
      %v1894 = vunpack.c.h.b16 %v1723
      %v1895 = vunpack.c.l.b16 %v1724
      %v1896 = vunpack.c.h.b16 %v1724
      %v1897 = vunpack.c.l.b16 %v1725
      %v1898 = vunpack.c.h.b16 %v1725
      %v1899 = vunpack.c.l.b16 %v1726
      %v1900 = vunpack.c.h.b16 %v1726
      %v1901 = vunpack.c.l.b16 %v1727
      %v1902 = vunpack.c.h.b16 %v1727
      %v1903 = vunpack.c.l.b16 %v1728
      %v1904 = vunpack.c.h.b16 %v1728
      %v1905 = vunpack.c.l.b16 %v1729
      %v1906 = vunpack.c.h.b16 %v1729
      %v1907 = vunpack.c.l.b16 %v1730
      %v1908 = vunpack.c.h.b16 %v1730
      %v1909 = vpack.c.b16 %v1821, %v1813
      %v1910 = vpack.c.b16 %v1822, %v1814
      %v1911 = vpack.c.b16 %v1823, %v1815
      %v1912 = vpack.c.b16 %v1824, %v1816
      %v1913 = vpack.c.b16 %v1825, %v1817
      %v1914 = vpack.c.b16 %v1826, %v1818
      %v1915 = vpack.c.b16 %v1827, %v1819
      %v1916 = vpack.c.b16 %v1828, %v1820
      %v1917 = vpack.c.b16 %v1837, %v1829
      %v1918 = vpack.c.b16 %v1838, %v1830
      %v1919 = vpack.c.b16 %v1839, %v1831
      %v1920 = vpack.c.b16 %v1840, %v1832
      %v1921 = vpack.c.b16 %v1841, %v1833
      %v1922 = vpack.c.b16 %v1842, %v1834
      %v1923 = vpack.c.b16 %v1843, %v1835
      %v1924 = vpack.c.b16 %v1844, %v1836
      %v1925 = vpack.c.b16 %v1853, %v1845
      %v1926 = vpack.c.b16 %v1854, %v1846
      %v1927 = vpack.c.b16 %v1855, %v1847
      %v1928 = vpack.c.b16 %v1856, %v1848
      %v1929 = vpack.c.b16 %v1857, %v1849
      %v1930 = vpack.c.b16 %v1858, %v1850
      %v1931 = vpack.c.b16 %v1859, %v1851
      %v1932 = vpack.c.b16 %v1860, %v1852
      %v1933 = vpack.c.b16 %v1869, %v1861
      %v1934 = vpack.c.b16 %v1870, %v1862
      %v1935 = vpack.c.b16 %v1871, %v1863
      %v1936 = vpack.c.b16 %v1872, %v1864
      %v1937 = vpack.c.b16 %v1873, %v1865
      %v1938 = vpack.c.b16 %v1874, %v1866
      %v1939 = vpack.c.b16 %v1875, %v1867
      %v1940 = vpack.c.b16 %v1876, %v1868
      %v1941 = vpack.c.b16 %v1885, %v1877
      %v1942 = vpack.c.b16 %v1886, %v1878
      %v1943 = vpack.c.b16 %v1887, %v1879
      %v1944 = vpack.c.b16 %v1888, %v1880
      %v1945 = vpack.c.b16 %v1889, %v1881
      %v1946 = vpack.c.b16 %v1890, %v1882
      %v1947 = vpack.c.b16 %v1891, %v1883
      %v1948 = vpack.c.b16 %v1892, %v1884
      %v1949 = vpack.c.b16 %v1901, %v1893
      %v1950 = vpack.c.b16 %v1902, %v1894
      %v1951 = vpack.c.b16 %v1903, %v1895
      %v1952 = vpack.c.b16 %v1904, %v1896
      %v1953 = vpack.c.b16 %v1905, %v1897
      %v1954 = vpack.c.b16 %v1906, %v1898
      %v1955 = vpack.c.b16 %v1907, %v1899
      %v1956 = vpack.c.b16 %v1908, %v1900
      %vm2005 = vcmask 785408
      %v2007 = vsel %vm2005, %v1763, 0
      %v2010 = vsel %vm2005, %v1764, 0
      %2012 = vmatpush.bf16.msra.mxu0 0
      %2013 = vmatpush.bf16.msra.mxu0 0
      %2014 = vmatpush.bf16.msra.mxu0 %v1949
      %2015 = vmatpush.bf16.msra.mxu0 %v1941
      %2016 = vmatpush.bf16.msra.mxu0 %v1933
      %2017 = vmatpush.bf16.msra.mxu0 %v1925
      %2018 = vmatpush.bf16.msra.mxu0 %v1917
      %2019 = vmatpush.bf16.msra.mxu0 %v1909
      %2020 = vmatmul.bf16.gmra.mxu0 %v2007
      %v2021 = vpop.f32.mrf.mxu0
      %v2022 = vadd.f32 %v1738, %v2021
      %v2023 = vpop.f32.mrf.mxu0
      %v2024 = vadd.f32 %v1743, %v2023
      %2025 = vmatmul.bf16.gmra.mxu0 %v2010
      %v2026 = vpop.f32.mrf.mxu0
      %v2027 = vadd.f32 %v1748, %v2026
      %v2028 = vpop.f32.mrf.mxu0
      %v2029 = vadd.f32 %v1753, %v2028
      %2030 = vdwg.mxu0
      %2031 = vmatpush.bf16.msra.mxu0 0
      %2032 = vmatpush.bf16.msra.mxu0 0
      %2033 = vmatpush.bf16.msra.mxu0 %v1950
      %2034 = vmatpush.bf16.msra.mxu0 %v1942
      %2035 = vmatpush.bf16.msra.mxu0 %v1934
      %2036 = vmatpush.bf16.msra.mxu0 %v1926
      %2037 = vmatpush.bf16.msra.mxu0 %v1918
      %2038 = vmatpush.bf16.msra.mxu0 %v1910
      %2039 = vmatmul.bf16.gmra.mxu0 %v2007
      %v2040 = vpop.f32.mrf.mxu0
      %v2041 = vadd.f32 %v1738, %v2040
      %v2042 = vpop.f32.mrf.mxu0
      %v2043 = vadd.f32 %v1743, %v2042
      %2044 = vmatmul.bf16.gmra.mxu0 %v2010
      %v2045 = vpop.f32.mrf.mxu0
      %v2046 = vadd.f32 %v1748, %v2045
      %v2047 = vpop.f32.mrf.mxu0
      %v2048 = vadd.f32 %v1753, %v2047
      %2049 = vdwg.mxu0
      %2050 = vmatpush.bf16.msra.mxu0 0
      %2051 = vmatpush.bf16.msra.mxu0 0
      %2052 = vmatpush.bf16.msra.mxu0 %v1951
      %2053 = vmatpush.bf16.msra.mxu0 %v1943
      %2054 = vmatpush.bf16.msra.mxu0 %v1935
      %2055 = vmatpush.bf16.msra.mxu0 %v1927
      %2056 = vmatpush.bf16.msra.mxu0 %v1919
      %2057 = vmatpush.bf16.msra.mxu0 %v1911
      %2058 = vmatmul.bf16.gmra.mxu0 %v2007
      %v2059 = vpop.f32.mrf.mxu0
      %v2060 = vadd.f32 %v1738, %v2059
      %v2061 = vpop.f32.mrf.mxu0
      %v2062 = vadd.f32 %v1743, %v2061
      %2063 = vmatmul.bf16.gmra.mxu0 %v2010
      %v2064 = vpop.f32.mrf.mxu0
      %v2065 = vadd.f32 %v1748, %v2064
      %v2066 = vpop.f32.mrf.mxu0
      %v2067 = vadd.f32 %v1753, %v2066
      %2068 = vdwg.mxu0
      %2069 = vmatpush.bf16.msra.mxu0 0
      %2070 = vmatpush.bf16.msra.mxu0 0
      %2071 = vmatpush.bf16.msra.mxu0 %v1952
      %2072 = vmatpush.bf16.msra.mxu0 %v1944
      %2073 = vmatpush.bf16.msra.mxu0 %v1936
      %2074 = vmatpush.bf16.msra.mxu0 %v1928
      %2075 = vmatpush.bf16.msra.mxu0 %v1920
      %2076 = vmatpush.bf16.msra.mxu0 %v1912
      %2077 = vmatmul.bf16.gmra.mxu0 %v2007
      %v2078 = vpop.f32.mrf.mxu0
      %v2079 = vadd.f32 %v1738, %v2078
      %v2080 = vpop.f32.mrf.mxu0
      %v2081 = vadd.f32 %v1743, %v2080
      %2082 = vmatmul.bf16.gmra.mxu0 %v2010
      %v2083 = vpop.f32.mrf.mxu0
      %v2084 = vadd.f32 %v1748, %v2083
      %v2085 = vpop.f32.mrf.mxu0
      %v2086 = vadd.f32 %v1753, %v2085
      %2087 = vdwg.mxu0
      %2088 = vmatpush.bf16.msra.mxu0 0
      %2089 = vmatpush.bf16.msra.mxu0 0
      %2090 = vmatpush.bf16.msra.mxu0 %v1953
      %2091 = vmatpush.bf16.msra.mxu0 %v1945
      %2092 = vmatpush.bf16.msra.mxu0 %v1937
      %2093 = vmatpush.bf16.msra.mxu0 %v1929
      %2094 = vmatpush.bf16.msra.mxu0 %v1921
      %2095 = vmatpush.bf16.msra.mxu0 %v1913
      %2096 = vmatmul.bf16.gmra.mxu0 %v2007
      %v2097 = vpop.f32.mrf.mxu0
      %v2098 = vadd.f32 %v1738, %v2097
      %v2099 = vpop.f32.mrf.mxu0
      %v2100 = vadd.f32 %v1743, %v2099
      %2101 = vmatmul.bf16.gmra.mxu0 %v2010
      %v2102 = vpop.f32.mrf.mxu0
      %v2103 = vadd.f32 %v1748, %v2102
      %v2104 = vpop.f32.mrf.mxu0
      %v2105 = vadd.f32 %v1753, %v2104
      %2106 = vdwg.mxu0
      %2107 = vmatpush.bf16.msra.mxu0 0
      %2108 = vmatpush.bf16.msra.mxu0 0
      %2109 = vmatpush.bf16.msra.mxu0 %v1954
      %2110 = vmatpush.bf16.msra.mxu0 %v1946
      %2111 = vmatpush.bf16.msra.mxu0 %v1938
      %2112 = vmatpush.bf16.msra.mxu0 %v1930
      %2113 = vmatpush.bf16.msra.mxu0 %v1922
      %2114 = vmatpush.bf16.msra.mxu0 %v1914
      %2115 = vmatmul.bf16.gmra.mxu0 %v2007
      %v2116 = vpop.f32.mrf.mxu0
      %v2117 = vadd.f32 %v1738, %v2116
      %v2118 = vpop.f32.mrf.mxu0
      %v2119 = vadd.f32 %v1743, %v2118
      %2120 = vmatmul.bf16.gmra.mxu0 %v2010
      %v2121 = vpop.f32.mrf.mxu0
      %v2122 = vadd.f32 %v1748, %v2121
      %v2123 = vpop.f32.mrf.mxu0
      %v2124 = vadd.f32 %v1753, %v2123
      %2125 = vdwg.mxu0
      %2126 = vmatpush.bf16.msra.mxu0 0
      %2127 = vmatpush.bf16.msra.mxu0 0
      %2128 = vmatpush.bf16.msra.mxu0 %v1955
      %2129 = vmatpush.bf16.msra.mxu0 %v1947
      %2130 = vmatpush.bf16.msra.mxu0 %v1939
      %2131 = vmatpush.bf16.msra.mxu0 %v1931
      %2132 = vmatpush.bf16.msra.mxu0 %v1923
      %2133 = vmatpush.bf16.msra.mxu0 %v1915
      %2134 = vmatmul.bf16.gmra.mxu0 %v2007
      %v2135 = vpop.f32.mrf.mxu0
      %v2136 = vadd.f32 %v1738, %v2135
      %v2137 = vpop.f32.mrf.mxu0
      %v2138 = vadd.f32 %v1743, %v2137
      %2139 = vmatmul.bf16.gmra.mxu0 %v2010
      %v2140 = vpop.f32.mrf.mxu0
      %v2141 = vadd.f32 %v1748, %v2140
      %v2142 = vpop.f32.mrf.mxu0
      %v2143 = vadd.f32 %v1753, %v2142
      %2144 = vdwg.mxu0
      %2145 = vmatpush.bf16.msra.mxu0 0
      %2146 = vmatpush.bf16.msra.mxu0 0
      %2147 = vmatpush.bf16.msra.mxu0 %v1956
      %2148 = vmatpush.bf16.msra.mxu0 %v1948
      %2149 = vmatpush.bf16.msra.mxu0 %v1940
      %2150 = vmatpush.bf16.msra.mxu0 %v1932
      %2151 = vmatpush.bf16.msra.mxu0 %v1924
      %2152 = vmatpush.bf16.msra.mxu0 %v1916
      %2153 = vmatmul.bf16.gmra.mxu0 %v2007
      %v2154 = vpop.f32.mrf.mxu0
      %v2155 = vadd.f32 %v1738, %v2154
      %v2156 = vpop.f32.mrf.mxu0
      %v2157 = vadd.f32 %v1743, %v2156
      %2158 = vmatmul.bf16.gmra.mxu0 %v2010
      %v2159 = vpop.f32.mrf.mxu0
      %v2160 = vadd.f32 %v1748, %v2159
      %v2161 = vpop.f32.mrf.mxu0
      %v2162 = vadd.f32 %v1753, %v2161
      %2163 = vdwg.mxu0
      %2164 = vst [vmem:[%s224] sm:$0xff] %v2022
      %2165 = vst [vmem:[%s224 + $0x8] sm:$0xff] %v2041
      %2166 = vst [vmem:[%s224 + $0x10] sm:$0xff] %v2060
      %2167 = vst [vmem:[%s224 + $0x18] sm:$0xff] %v2079
      %2168 = vst [vmem:[%s224 + $0x20] sm:$0xff] %v2098
      %2169 = vst [vmem:[%s224 + $0x28] sm:$0xff] %v2117
      %2170 = vst [vmem:[%s224 + $0x30] sm:$0xff] %v2136
      %2171 = vst [vmem:[%s224 + $0x38] sm:$0xff] %v2155
      %2172 = vst [vmem:[%s224 + $0x40] sm:$0xff] %v2024
      %2173 = vst [vmem:[%s224 + $0x48] sm:$0xff] %v2043
      %2174 = vst [vmem:[%s224 + $0x50] sm:$0xff] %v2062
      %2175 = vst [vmem:[%s224 + $0x58] sm:$0xff] %v2081
      %2176 = vst [vmem:[%s224 + $0x60] sm:$0xff] %v2100
      %2177 = vst [vmem:[%s224 + $0x68] sm:$0xff] %v2119
      %2178 = vst [vmem:[%s224 + $0x70] sm:$0xff] %v2138
      %2179 = vst [vmem:[%s224 + $0x78] sm:$0xff] %v2157
      %2180 = vst [vmem:[%s224 + $0x80] sm:$0xff] %v2027
      %2181 = vst [vmem:[%s224 + $0x88] sm:$0xff] %v2046
      %2182 = vst [vmem:[%s224 + $0x90] sm:$0xff] %v2065
      %2183 = vst [vmem:[%s224 + $0x98] sm:$0xff] %v2084
      %2184 = vst [vmem:[%s224 + $0xa0] sm:$0xff] %v2103
      %2185 = vst [vmem:[%s224 + $0xa8] sm:$0xff] %v2122
      %2186 = vst [vmem:[%s224 + $0xb0] sm:$0xff] %v2141
      %2187 = vst [vmem:[%s224 + $0xb8] sm:$0xff] %v2160
      %2188 = vst [vmem:[%s224 + $0xc0] sm:$0xff] %v2029
      %2189 = vst [vmem:[%s224 + $0xc8] sm:$0xff] %v2048
      %2190 = vst [vmem:[%s224 + $0xd0] sm:$0xff] %v2067
      %2191 = vst [vmem:[%s224 + $0xd8] sm:$0xff] %v2086
      %2192 = vst [vmem:[%s224 + $0xe0] sm:$0xff] %v2105
      %2193 = vst [vmem:[%s224 + $0xe8] sm:$0xff] %v2124
      %2194 = vst [vmem:[%s224 + $0xf0] sm:$0xff] %v2143
      %2195 = vst [vmem:[%s224 + $0xf8] sm:$0xff] %v2162
      %p2196 = scmp.lt.s32.totalorder %s16, 1
      %s2197 = scalar_select %p2196, %s16, 1
      %s2198 = smul.addr %s2197, 32
      %s2199 = smul.addr %s2198, 8
      %s2200 = scalar_lea.vmem %s5, %s2199
      // Predicated region
      $region41: #{r2p1d_forward.1} parent=39 // pred_check
        %p2201 = pneg %p144
      $region42: #{r2p1d_forward.1} parent=39 // pred_check_branch
        %2203 = sbr.rel (%p2201) target = $region44
      $region43: #{r2p1d_forward.1} parent=39 // pred_region
        _
      $region44: #{r2p1d_forward.1} parent=39 // pred_fallthru
        _
    $region40: #{r2p1d_forward.1} parent=5 // pred_fallthru
      _
    %p2204 = scmp.le.s32.totalorder 2, %s11
    // Predicated region
    $region45: #{r2p1d_forward.1} parent=5 // pred_check
      %p2205 = pneg %p2204
    $region46: #{r2p1d_forward.1} parent=5 // pred_check_branch
      %2207 = sbr.rel (%p2205) target = $region48
    $region47: #{r2p1d_forward.1} parent=5 // pred_region
      %s2208 = ssub.s32 %s11, 2
      // Predicated region
      $region49: #{r2p1d_forward.1} parent=47 // pred_check
        %p2209 = pneg %p150
      $region50: #{r2p1d_forward.1} parent=47 // pred_check_branch
        %2211 = sbr.rel (%p2209) target = $region52
      $region51: #{r2p1d_forward.1} parent=47 // pred_region
        %p2212 = scmp.lt.s32.totalorder %s17, 1
        %s2213 = scalar_select %p2212, %s17, 1
        %s2214 = smul.addr %s2213, 32
        %s2215 = smul.addr %s2214, 8
        %s2216 = scalar_lea.vmem %s5, %s2215
      $region52: #{r2p1d_forward.1} parent=47 // pred_fallthru
        _
    $region48: #{r2p1d_forward.1} parent=5 // pred_fallthru
      _
  $region6: #{r2p1d_forward.1} parent=0 // loop_footer
    %s15 = sadd.s32 1, %s11
  $region7: #{r2p1d_forward.1} parent=0 // loop_footer_branch
    %10 = sbr.rel target = $region3
  $region8: #{r2p1d_forward.1} parent=0 // loop_exit
    _

</llo_original>
